<compile_context>
chip_gen: v5e
topology: v5e:2x2
jax: 0.10.0
libtpu: 0.0.40
codegen_flags: <defaults>
</compile_context>

<pallas_src>
import functools

import jax
import jax.numpy as jnp
from jax import lax
from jax.experimental import pallas as pl
from jax.experimental.pallas import tpu as pltpu

OUT_PAD = 128  # lane-dense padded width of the final linear output (>= num_kp*2)


def gru_pred_kernel(x_ref, wih_ref, whh_ref, bgi_ref, bhn_ref,
                    wlin_ref, blin_ref, out_ref, gi_hist, h_hist, *, bs, d):
    """Whole-sequence GRU + output Linear + tanh, single core.

    x_ref   : (d*bs, in_sz)   f32  time-major rows (row t*bs+b = step t, batch b)
    wih_ref : (in_sz, 3H)     f32  input->gates  (gate order r, z, n)
    whh_ref : (H, 3H)         f32  hidden->gates
    bgi_ref : (1, 3H)         f32  b_ih + [b_hh_r, b_hh_z, 0]  (folded, hoisted)
    bhn_ref : (1, H)          f32  b_hh_n (must remain inside r * (...))
    wlin_ref: (H, OUT_PAD)    f32  zero-padded output projection
    blin_ref: (1, OUT_PAD)    f32
    out_ref : (d*bs, OUT_PAD) f32  tanh(linear(h_t)) slab
    gi_hist : (d*bs, 3H)      f32  scratch: hoisted input projections
    h_hist  : (d*bs, H)       f32  scratch: per-step hidden states
    """
    H = whh_ref.shape[0]

    # (1) Input projection for ALL timesteps hoisted out of the recurrence:
    #     one matmul with M = d*bs instead of d matmuls with M = bs.
    gi_hist[...] = (
        jnp.dot(x_ref[...], wih_ref[...], preferred_element_type=jnp.float32)
        + bgi_ref[...])

    whh = whh_ref[...]
    bhn = bhn_ref[...]

    # (2) Serial recurrence: only h @ whh remains in the loop; h is carried as
    #     a value (vregs).  d is small & static -> fully unrolled Python loop
    #     (static slices, full scheduling visibility).
    h = jnp.zeros((bs, H), jnp.float32)
    for t in range(d):
        row = t * bs
        gi = gi_hist[pl.ds(row, bs), :]                               # (bs, 3H)
        gh = jnp.dot(h, whh, preferred_element_type=jnp.float32)      # (bs, 3H)
        r = jax.nn.sigmoid(gi[:, :H] + gh[:, :H])
        z = jax.nn.sigmoid(gi[:, H:2 * H] + gh[:, H:2 * H])
        n = jnp.tanh(gi[:, 2 * H:] + r * (gh[:, 2 * H:] + bhn))
        h = (1.0 - z) * n + z * h
        h_hist[pl.ds(row, bs), :] = h

    # (3) Output Linear + tanh deferred out of the loop: one big matmul and one
    #     lane-dense (128-wide) unmasked store.
    out_ref[...] = jnp.tanh(
        jnp.dot(h_hist[...], wlin_ref[...], preferred_element_type=jnp.float32)
        + blin_ref[...])


def init_params(key, num_kp=10, num_features=128):
    """Deterministic parameter init matching the PyTorch module's shapes
    (weights stored already transposed for the kernel)."""
    in_sz = num_kp * 2
    H = num_features
    ks = jax.random.split(key, 6)
    bound = 1.0 / jnp.sqrt(jnp.float32(H))
    u = lambda k, shape: jax.random.uniform(k, shape, jnp.float32, -bound, bound)
    return {
        "w_ih": u(ks[0], (in_sz, 3 * H)),    # torch weight_ih_l0.T
        "w_hh": u(ks[1], (H, 3 * H)),        # torch weight_hh_l0.T
        "b_ih": u(ks[2], (1, 3 * H)),
        "b_hh": u(ks[3], (1, 3 * H)),
        "w_lin": u(ks[4], (H, in_sz)),       # torch linear.weight.T
        "b_lin": u(ks[5], (1, in_sz)),
    }


def prediction_module_forward(kp_mean, params):
    """kp_mean: (bs, d, num_kp, 2) float32.  Returns {'mean': (bs, d, num_kp, 2)}."""
    bs, d, num_kp, two = kp_mean.shape
    in_sz = num_kp * two
    H = params["w_hh"].shape[0]
    assert in_sz <= OUT_PAD

    # Glue: flatten keypoints, go time-major, flatten (time, batch) into rows.
    x = (kp_mean.reshape(bs, d, in_sz)
                .transpose(1, 0, 2)
                .reshape(d * bs, in_sz)
                .astype(jnp.float32))

    # Fold the r/z pieces of b_hh into the hoisted input-projection bias;
    # b_hh_n must stay separate (it sits inside the r * (...) term).
    b_gi = params["b_ih"].at[:, :2 * H].add(params["b_hh"][:, :2 * H])
    b_hn = params["b_hh"][:, 2 * H:]

    # Lane-pad the output projection to OUT_PAD lanes (unmasked dense stores).
    w_lin_pad = jnp.zeros((H, OUT_PAD), jnp.float32).at[:, :in_sz].set(params["w_lin"])
    b_lin_pad = jnp.zeros((1, OUT_PAD), jnp.float32).at[:, :in_sz].set(params["b_lin"])

    vmem = pl.BlockSpec(memory_space=pltpu.MemorySpace.VMEM)
    kernel = functools.partial(gru_pred_kernel, bs=bs, d=d)
    # TODO(synk): at the module's real H=1024 / long sequences, cast weights to
    # bf16 and add a time-chunked grid + vmem_limit_bytes (v5e 16 MiB scoped /
    # v7x 64 MiB VMEM); not needed at these demo shapes.
    out = pl.pallas_call(
        kernel,
        out_shape=jax.ShapeDtypeStruct((d * bs, OUT_PAD), jnp.float32),
        in_specs=[vmem] * 7,
        out_specs=vmem,
        scratch_shapes=[pltpu.VMEM((d * bs, 3 * H), jnp.float32),
                        pltpu.VMEM((d * bs, H), jnp.float32)],
    )(x, params["w_ih"], params["w_hh"], b_gi, b_hn, w_lin_pad, b_lin_pad)

    y = out[:, :in_sz].reshape(d, bs, in_sz).transpose(1, 0, 2)
    return {"mean": y.reshape(bs, d, num_kp, two)}


def reference_forward(kp_mean, params):
    """Pure-JAX reference of the PyTorch forward (for sanity checking)."""
    bs, d, num_kp, two = kp_mean.shape
    in_sz = num_kp * two
    H = params["w_hh"].shape[0]
    x = kp_mean.reshape(bs, d, in_sz).astype(jnp.float32)

    def step(h, x_t):
        gi = x_t @ params["w_ih"] + params["b_ih"]
        gh = h @ params["w_hh"] + params["b_hh"]
        r = jax.nn.sigmoid(gi[:, :H] + gh[:, :H])
        z = jax.nn.sigmoid(gi[:, H:2 * H] + gh[:, H:2 * H])
        n = jnp.tanh(gi[:, 2 * H:] + r * gh[:, 2 * H:])
        h_new = (1.0 - z) * n + z * h
        y = jnp.tanh(h_new @ params["w_lin"] + params["b_lin"])
        return h_new, y

    h0 = jnp.zeros((bs, H), jnp.float32)
    _, ys = lax.scan(step, h0, jnp.swapaxes(x, 0, 1))   # (d, bs, in_sz)
    return {"mean": jnp.swapaxes(ys, 0, 1).reshape(bs, d, num_kp, two)}


if __name__ == "__main__":
    key = jax.random.PRNGKey(0)
    k_param, k_data = jax.random.split(key)

    num_kp = 10
    num_features = 128   # hidden size (kept small; module default is 1024)
    bs, d = 2, 8         # batch, sequence length

    params = init_params(k_param, num_kp=num_kp, num_features=num_features)
    kp_mean = jax.random.normal(k_data, (bs, d, num_kp, 2), jnp.float32)

    out = prediction_module_forward(kp_mean, params)
    jax.block_until_ready(out["mean"])

    ref = reference_forward(kp_mean, params)
    assert out["mean"].shape == (bs, d, num_kp, 2)
    assert jnp.allclose(out["mean"], ref["mean"], atol=5e-5, rtol=5e-5)

    print("KERNEL_OK")
</pallas_src>

<mosaic_0001>
module attributes {stable_mosaic.version = 11 : i64} {
  func.func @gru_pred_kernel(%arg0: memref<16x20xf32, #tpu.memory_space<vmem>>, %arg1: memref<20x384xf32, #tpu.memory_space<vmem>>, %arg2: memref<128x384xf32, #tpu.memory_space<vmem>>, %arg3: memref<1x384xf32, #tpu.memory_space<vmem>>, %arg4: memref<1x128xf32, #tpu.memory_space<vmem>>, %arg5: memref<128x128xf32, #tpu.memory_space<vmem>>, %arg6: memref<1x128xf32, #tpu.memory_space<vmem>>, %arg7: memref<16x128xf32, #tpu.memory_space<vmem>>, %arg8: memref<16x384xf32, #tpu.memory_space<vmem>>, %arg9: memref<16x128xf32, #tpu.memory_space<vmem>>) attributes {dimension_semantics = [], scalar_prefetch = 0 : i64, scratch_operands = 2 : i64, tpu.core_type = #tpu.core_type<tc>} {
    %c0 = arith.constant 0 : index
    %c0_0 = arith.constant 0 : index
    %0 = vector.load %arg0[%c0, %c0_0] : memref<16x20xf32, #tpu.memory_space<vmem>>, vector<16x20xf32>
    %c0_1 = arith.constant 0 : index
    %c0_2 = arith.constant 0 : index
    %1 = vector.load %arg1[%c0_1, %c0_2] : memref<20x384xf32, #tpu.memory_space<vmem>>, vector<20x384xf32>
    %cst = arith.constant dense<0.000000e+00> : vector<16x384xf32>
    %2 = tpu.matmul %0, %1, %cst {dimension_numbers = #tpu.dot_dimension_numbers<[1], [0], [0], [1], [0, 0, 1, 1], [], []>} : vector<16x20xf32>, vector<20x384xf32>, vector<16x384xf32> -> vector<16x384xf32>
    %c0_3 = arith.constant 0 : index
    %c0_4 = arith.constant 0 : index
    %3 = vector.load %arg3[%c0_3, %c0_4] : memref<1x384xf32, #tpu.memory_space<vmem>>, vector<1x384xf32>
    %4 = vector.broadcast %3 : vector<1x384xf32> to vector<16x384xf32>
    %5 = arith.addf %2, %4 : vector<16x384xf32>
    %c0_5 = arith.constant 0 : index
    %c0_6 = arith.constant 0 : index
    %6 = vector.load %arg8[%c0_5, %c0_6] : memref<16x384xf32, #tpu.memory_space<vmem>>, vector<16x384xf32>
    tpu.vector_store %arg8[%c0_5, %c0_6], %5 {strides = array<i32>} : memref<16x384xf32, #tpu.memory_space<vmem>>, vector<16x384xf32>,
    %c0_7 = arith.constant 0 : index
    %c0_8 = arith.constant 0 : index
    %7 = vector.load %arg2[%c0_7, %c0_8] : memref<128x384xf32, #tpu.memory_space<vmem>>, vector<128x384xf32>
    %c0_9 = arith.constant 0 : index
    %c0_10 = arith.constant 0 : index
    %8 = vector.load %arg4[%c0_9, %c0_10] : memref<1x128xf32, #tpu.memory_space<vmem>>, vector<1x128xf32>
    %cst_11 = arith.constant 0.000000e+00 : f32
    %9 = vector.broadcast %cst_11 : f32 to vector<2x128xf32>
    %c0_12 = arith.constant 0 : index
    %c0_13 = arith.constant 0 : index
    %10 = vector.load %arg8[%c0_12, %c0_13] : memref<16x384xf32, #tpu.memory_space<vmem>>, vector<2x384xf32>
    %cst_14 = arith.constant dense<0.000000e+00> : vector<2x384xf32>
    %11 = tpu.matmul %9, %7, %cst_14 {dimension_numbers = #tpu.dot_dimension_numbers<[1], [0], [0], [1], [0, 0, 1, 1], [], []>} : vector<2x128xf32>, vector<128x384xf32>, vector<2x384xf32> -> vector<2x384xf32>
    %12 = vector.extract_strided_slice %10 {offsets = [0, 0], sizes = [2, 128], strides = [1, 1]} : vector<2x384xf32> to vector<2x128xf32>
    %13 = vector.extract_strided_slice %11 {offsets = [0, 0], sizes = [2, 128], strides = [1, 1]} : vector<2x384xf32> to vector<2x128xf32>
    %14 = arith.addf %12, %13 : vector<2x128xf32>
    %15 = arith.negf %14 : vector<2x128xf32>
    %16 = math.exp %15 : vector<2x128xf32>
    %cst_15 = arith.constant 1.000000e+00 : f32
    %17 = vector.broadcast %cst_15 : f32 to vector<2x128xf32>
    %18 = arith.addf %17, %16 : vector<2x128xf32>
    %19 = arith.divf %17, %18 : vector<2x128xf32>
    %20 = vector.extract_strided_slice %10 {offsets = [0, 128], sizes = [2, 128], strides = [1, 1]} : vector<2x384xf32> to vector<2x128xf32>
    %21 = vector.extract_strided_slice %11 {offsets = [0, 128], sizes = [2, 128], strides = [1, 1]} : vector<2x384xf32> to vector<2x128xf32>
    %22 = arith.addf %20, %21 : vector<2x128xf32>
    %23 = arith.negf %22 : vector<2x128xf32>
    %24 = math.exp %23 : vector<2x128xf32>
    %cst_16 = arith.constant 1.000000e+00 : f32
    %25 = vector.broadcast %cst_16 : f32 to vector<2x128xf32>
    %26 = arith.addf %25, %24 : vector<2x128xf32>
    %27 = arith.divf %25, %26 : vector<2x128xf32>
    %28 = vector.extract_strided_slice %10 {offsets = [0, 256], sizes = [2, 128], strides = [1, 1]} : vector<2x384xf32> to vector<2x128xf32>
    %29 = vector.extract_strided_slice %11 {offsets = [0, 256], sizes = [2, 128], strides = [1, 1]} : vector<2x384xf32> to vector<2x128xf32>
    %30 = vector.broadcast %8 : vector<1x128xf32> to vector<2x128xf32>
    %31 = arith.addf %29, %30 : vector<2x128xf32>
    %32 = arith.mulf %19, %31 : vector<2x128xf32>
    %33 = arith.addf %28, %32 : vector<2x128xf32>
    %34 = math.tanh %33 : vector<2x128xf32>
    %cst_17 = arith.constant 1.000000e+00 : f32
    %35 = vector.broadcast %cst_17 : f32 to vector<2x128xf32>
    %36 = arith.subf %35, %27 : vector<2x128xf32>
    %37 = arith.mulf %36, %34 : vector<2x128xf32>
    %38 = arith.mulf %27, %9 : vector<2x128xf32>
    %39 = arith.addf %37, %38 : vector<2x128xf32>
    %c0_18 = arith.constant 0 : index
    %c0_19 = arith.constant 0 : index
    %40 = vector.load %arg9[%c0_18, %c0_19] : memref<16x128xf32, #tpu.memory_space<vmem>>, vector<2x128xf32>
    tpu.vector_store %arg9[%c0_18, %c0_19], %39 {strides = array<i32>} : memref<16x128xf32, #tpu.memory_space<vmem>>, vector<2x128xf32>,
    %c2 = arith.constant 2 : index
    %c0_20 = arith.constant 0 : index
    %41 = vector.load %arg8[%c2, %c0_20] : memref<16x384xf32, #tpu.memory_space<vmem>>, vector<2x384xf32>
    %cst_21 = arith.constant dense<0.000000e+00> : vector<2x384xf32>
    %42 = tpu.matmul %39, %7, %cst_21 {dimension_numbers = #tpu.dot_dimension_numbers<[1], [0], [0], [1], [0, 0, 1, 1], [], []>} : vector<2x128xf32>, vector<128x384xf32>, vector<2x384xf32> -> vector<2x384xf32>
    %43 = vector.extract_strided_slice %41 {offsets = [0, 0], sizes = [2, 128], strides = [1, 1]} : vector<2x384xf32> to vector<2x128xf32>
    %44 = vector.extract_strided_slice %42 {offsets = [0, 0], sizes = [2, 128], strides = [1, 1]} : vector<2x384xf32> to vector<2x128xf32>
    %45 = arith.addf %43, %44 : vector<2x128xf32>
    %46 = arith.negf %45 : vector<2x128xf32>
    %47 = math.exp %46 : vector<2x128xf32>
    %cst_22 = arith.constant 1.000000e+00 : f32
    %48 = vector.broadcast %cst_22 : f32 to vector<2x128xf32>
    %49 = arith.addf %48, %47 : vector<2x128xf32>
    %50 = arith.divf %48, %49 : vector<2x128xf32>
    %51 = vector.extract_strided_slice %41 {offsets = [0, 128], sizes = [2, 128], strides = [1, 1]} : vector<2x384xf32> to vector<2x128xf32>
    %52 = vector.extract_strided_slice %42 {offsets = [0, 128], sizes = [2, 128], strides = [1, 1]} : vector<2x384xf32> to vector<2x128xf32>
    %53 = arith.addf %51, %52 : vector<2x128xf32>
    %54 = arith.negf %53 : vector<2x128xf32>
    %55 = math.exp %54 : vector<2x128xf32>
    %cst_23 = arith.constant 1.000000e+00 : f32
    %56 = vector.broadcast %cst_23 : f32 to vector<2x128xf32>
    %57 = arith.addf %56, %55 : vector<2x128xf32>
    %58 = arith.divf %56, %57 : vector<2x128xf32>
    %59 = vector.extract_strided_slice %41 {offsets = [0, 256], sizes = [2, 128], strides = [1, 1]} : vector<2x384xf32> to vector<2x128xf32>
    %60 = vector.extract_strided_slice %42 {offsets = [0, 256], sizes = [2, 128], strides = [1, 1]} : vector<2x384xf32> to vector<2x128xf32>
    %61 = vector.broadcast %8 : vector<1x128xf32> to vector<2x128xf32>
    %62 = arith.addf %60, %61 : vector<2x128xf32>
    %63 = arith.mulf %50, %62 : vector<2x128xf32>
    %64 = arith.addf %59, %63 : vector<2x128xf32>
    %65 = math.tanh %64 : vector<2x128xf32>
    %cst_24 = arith.constant 1.000000e+00 : f32
    %66 = vector.broadcast %cst_24 : f32 to vector<2x128xf32>
    %67 = arith.subf %66, %58 : vector<2x128xf32>
    %68 = arith.mulf %67, %65 : vector<2x128xf32>
    %69 = arith.mulf %58, %39 : vector<2x128xf32>
    %70 = arith.addf %68, %69 : vector<2x128xf32>
    %c2_25 = arith.constant 2 : index
    %c0_26 = arith.constant 0 : index
    %71 = vector.load %arg9[%c2_25, %c0_26] : memref<16x128xf32, #tpu.memory_space<vmem>>, vector<2x128xf32>
    tpu.vector_store %arg9[%c2_25, %c0_26], %70 {strides = array<i32>} : memref<16x128xf32, #tpu.memory_space<vmem>>, vector<2x128xf32>,
    %c4 = arith.constant 4 : index
    %c0_27 = arith.constant 0 : index
    %72 = vector.load %arg8[%c4, %c0_27] : memref<16x384xf32, #tpu.memory_space<vmem>>, vector<2x384xf32>
    %cst_28 = arith.constant dense<0.000000e+00> : vector<2x384xf32>
    %73 = tpu.matmul %70, %7, %cst_28 {dimension_numbers = #tpu.dot_dimension_numbers<[1], [0], [0], [1], [0, 0, 1, 1], [], []>} : vector<2x128xf32>, vector<128x384xf32>, vector<2x384xf32> -> vector<2x384xf32>
    %74 = vector.extract_strided_slice %72 {offsets = [0, 0], sizes = [2, 128], strides = [1, 1]} : vector<2x384xf32> to vector<2x128xf32>
    %75 = vector.extract_strided_slice %73 {offsets = [0, 0], sizes = [2, 128], strides = [1, 1]} : vector<2x384xf32> to vector<2x128xf32>
    %76 = arith.addf %74, %75 : vector<2x128xf32>
    %77 = arith.negf %76 : vector<2x128xf32>
    %78 = math.exp %77 : vector<2x128xf32>
    %cst_29 = arith.constant 1.000000e+00 : f32
    %79 = vector.broadcast %cst_29 : f32 to vector<2x128xf32>
    %80 = arith.addf %79, %78 : vector<2x128xf32>
    %81 = arith.divf %79, %80 : vector<2x128xf32>
    %82 = vector.extract_strided_slice %72 {offsets = [0, 128], sizes = [2, 128], strides = [1, 1]} : vector<2x384xf32> to vector<2x128xf32>
    %83 = vector.extract_strided_slice %73 {offsets = [0, 128], sizes = [2, 128], strides = [1, 1]} : vector<2x384xf32> to vector<2x128xf32>
    %84 = arith.addf %82, %83 : vector<2x128xf32>
    %85 = arith.negf %84 : vector<2x128xf32>
    %86 = math.exp %85 : vector<2x128xf32>
    %cst_30 = arith.constant 1.000000e+00 : f32
    %87 = vector.broadcast %cst_30 : f32 to vector<2x128xf32>
    %88 = arith.addf %87, %86 : vector<2x128xf32>
    %89 = arith.divf %87, %88 : vector<2x128xf32>
    %90 = vector.extract_strided_slice %72 {offsets = [0, 256], sizes = [2, 128], strides = [1, 1]} : vector<2x384xf32> to vector<2x128xf32>
    %91 = vector.extract_strided_slice %73 {offsets = [0, 256], sizes = [2, 128], strides = [1, 1]} : vector<2x384xf32> to vector<2x128xf32>
    %92 = vector.broadcast %8 : vector<1x128xf32> to vector<2x128xf32>
    %93 = arith.addf %91, %92 : vector<2x128xf32>
    %94 = arith.mulf %81, %93 : vector<2x128xf32>
    %95 = arith.addf %90, %94 : vector<2x128xf32>
    %96 = math.tanh %95 : vector<2x128xf32>
    %cst_31 = arith.constant 1.000000e+00 : f32
    %97 = vector.broadcast %cst_31 : f32 to vector<2x128xf32>
    %98 = arith.subf %97, %89 : vector<2x128xf32>
    %99 = arith.mulf %98, %96 : vector<2x128xf32>
    %100 = arith.mulf %89, %70 : vector<2x128xf32>
    %101 = arith.addf %99, %100 : vector<2x128xf32>
    %c4_32 = arith.constant 4 : index
    %c0_33 = arith.constant 0 : index
    %102 = vector.load %arg9[%c4_32, %c0_33] : memref<16x128xf32, #tpu.memory_space<vmem>>, vector<2x128xf32>
    tpu.vector_store %arg9[%c4_32, %c0_33], %101 {strides = array<i32>} : memref<16x128xf32, #tpu.memory_space<vmem>>, vector<2x128xf32>,
    %c6 = arith.constant 6 : index
    %c0_34 = arith.constant 0 : index
    %103 = vector.load %arg8[%c6, %c0_34] : memref<16x384xf32, #tpu.memory_space<vmem>>, vector<2x384xf32>
    %cst_35 = arith.constant dense<0.000000e+00> : vector<2x384xf32>
    %104 = tpu.matmul %101, %7, %cst_35 {dimension_numbers = #tpu.dot_dimension_numbers<[1], [0], [0], [1], [0, 0, 1, 1], [], []>} : vector<2x128xf32>, vector<128x384xf32>, vector<2x384xf32> -> vector<2x384xf32>
    %105 = vector.extract_strided_slice %103 {offsets = [0, 0], sizes = [2, 128], strides = [1, 1]} : vector<2x384xf32> to vector<2x128xf32>
    %106 = vector.extract_strided_slice %104 {offsets = [0, 0], sizes = [2, 128], strides = [1, 1]} : vector<2x384xf32> to vector<2x128xf32>
    %107 = arith.addf %105, %106 : vector<2x128xf32>
    %108 = arith.negf %107 : vector<2x128xf32>
    %109 = math.exp %108 : vector<2x128xf32>
    %cst_36 = arith.constant 1.000000e+00 : f32
    %110 = vector.broadcast %cst_36 : f32 to vector<2x128xf32>
    %111 = arith.addf %110, %109 : vector<2x128xf32>
    %112 = arith.divf %110, %111 : vector<2x128xf32>
    %113 = vector.extract_strided_slice %103 {offsets = [0, 128], sizes = [2, 128], strides = [1, 1]} : vector<2x384xf32> to vector<2x128xf32>
    %114 = vector.extract_strided_slice %104 {offsets = [0, 128], sizes = [2, 128], strides = [1, 1]} : vector<2x384xf32> to vector<2x128xf32>
    %115 = arith.addf %113, %114 : vector<2x128xf32>
    %116 = arith.negf %115 : vector<2x128xf32>
    %117 = math.exp %116 : vector<2x128xf32>
    %cst_37 = arith.constant 1.000000e+00 : f32
    %118 = vector.broadcast %cst_37 : f32 to vector<2x128xf32>
    %119 = arith.addf %118, %117 : vector<2x128xf32>
    %120 = arith.divf %118, %119 : vector<2x128xf32>
    %121 = vector.extract_strided_slice %103 {offsets = [0, 256], sizes = [2, 128], strides = [1, 1]} : vector<2x384xf32> to vector<2x128xf32>
    %122 = vector.extract_strided_slice %104 {offsets = [0, 256], sizes = [2, 128], strides = [1, 1]} : vector<2x384xf32> to vector<2x128xf32>
    %123 = vector.broadcast %8 : vector<1x128xf32> to vector<2x128xf32>
    %124 = arith.addf %122, %123 : vector<2x128xf32>
    %125 = arith.mulf %112, %124 : vector<2x128xf32>
    %126 = arith.addf %121, %125 : vector<2x128xf32>
    %127 = math.tanh %126 : vector<2x128xf32>
    %cst_38 = arith.constant 1.000000e+00 : f32
    %128 = vector.broadcast %cst_38 : f32 to vector<2x128xf32>
    %129 = arith.subf %128, %120 : vector<2x128xf32>
    %130 = arith.mulf %129, %127 : vector<2x128xf32>
    %131 = arith.mulf %120, %101 : vector<2x128xf32>
    %132 = arith.addf %130, %131 : vector<2x128xf32>
    %c6_39 = arith.constant 6 : index
    %c0_40 = arith.constant 0 : index
    %133 = vector.load %arg9[%c6_39, %c0_40] : memref<16x128xf32, #tpu.memory_space<vmem>>, vector<2x128xf32>
    tpu.vector_store %arg9[%c6_39, %c0_40], %132 {strides = array<i32>} : memref<16x128xf32, #tpu.memory_space<vmem>>, vector<2x128xf32>,
    %c8 = arith.constant 8 : index
    %c0_41 = arith.constant 0 : index
    %134 = vector.load %arg8[%c8, %c0_41] : memref<16x384xf32, #tpu.memory_space<vmem>>, vector<2x384xf32>
    %cst_42 = arith.constant dense<0.000000e+00> : vector<2x384xf32>
    %135 = tpu.matmul %132, %7, %cst_42 {dimension_numbers = #tpu.dot_dimension_numbers<[1], [0], [0], [1], [0, 0, 1, 1], [], []>} : vector<2x128xf32>, vector<128x384xf32>, vector<2x384xf32> -> vector<2x384xf32>
    %136 = vector.extract_strided_slice %134 {offsets = [0, 0], sizes = [2, 128], strides = [1, 1]} : vector<2x384xf32> to vector<2x128xf32>
    %137 = vector.extract_strided_slice %135 {offsets = [0, 0], sizes = [2, 128], strides = [1, 1]} : vector<2x384xf32> to vector<2x128xf32>
    %138 = arith.addf %136, %137 : vector<2x128xf32>
    %139 = arith.negf %138 : vector<2x128xf32>
    %140 = math.exp %139 : vector<2x128xf32>
    %cst_43 = arith.constant 1.000000e+00 : f32
    %141 = vector.broadcast %cst_43 : f32 to vector<2x128xf32>
    %142 = arith.addf %141, %140 : vector<2x128xf32>
    %143 = arith.divf %141, %142 : vector<2x128xf32>
    %144 = vector.extract_strided_slice %134 {offsets = [0, 128], sizes = [2, 128], strides = [1, 1]} : vector<2x384xf32> to vector<2x128xf32>
    %145 = vector.extract_strided_slice %135 {offsets = [0, 128], sizes = [2, 128], strides = [1, 1]} : vector<2x384xf32> to vector<2x128xf32>
    %146 = arith.addf %144, %145 : vector<2x128xf32>
    %147 = arith.negf %146 : vector<2x128xf32>
    %148 = math.exp %147 : vector<2x128xf32>
    %cst_44 = arith.constant 1.000000e+00 : f32
    %149 = vector.broadcast %cst_44 : f32 to vector<2x128xf32>
    %150 = arith.addf %149, %148 : vector<2x128xf32>
    %151 = arith.divf %149, %150 : vector<2x128xf32>
    %152 = vector.extract_strided_slice %134 {offsets = [0, 256], sizes = [2, 128], strides = [1, 1]} : vector<2x384xf32> to vector<2x128xf32>
    %153 = vector.extract_strided_slice %135 {offsets = [0, 256], sizes = [2, 128], strides = [1, 1]} : vector<2x384xf32> to vector<2x128xf32>
    %154 = vector.broadcast %8 : vector<1x128xf32> to vector<2x128xf32>
    %155 = arith.addf %153, %154 : vector<2x128xf32>
    %156 = arith.mulf %143, %155 : vector<2x128xf32>
    %157 = arith.addf %152, %156 : vector<2x128xf32>
    %158 = math.tanh %157 : vector<2x128xf32>
    %cst_45 = arith.constant 1.000000e+00 : f32
    %159 = vector.broadcast %cst_45 : f32 to vector<2x128xf32>
    %160 = arith.subf %159, %151 : vector<2x128xf32>
    %161 = arith.mulf %160, %158 : vector<2x128xf32>
    %162 = arith.mulf %151, %132 : vector<2x128xf32>
    %163 = arith.addf %161, %162 : vector<2x128xf32>
    %c8_46 = arith.constant 8 : index
    %c0_47 = arith.constant 0 : index
    %164 = vector.load %arg9[%c8_46, %c0_47] : memref<16x128xf32, #tpu.memory_space<vmem>>, vector<2x128xf32>
    tpu.vector_store %arg9[%c8_46, %c0_47], %163 {strides = array<i32>} : memref<16x128xf32, #tpu.memory_space<vmem>>, vector<2x128xf32>,
    %c10 = arith.constant 10 : index
    %c0_48 = arith.constant 0 : index
    %165 = vector.load %arg8[%c10, %c0_48] : memref<16x384xf32, #tpu.memory_space<vmem>>, vector<2x384xf32>
    %cst_49 = arith.constant dense<0.000000e+00> : vector<2x384xf32>
    %166 = tpu.matmul %163, %7, %cst_49 {dimension_numbers = #tpu.dot_dimension_numbers<[1], [0], [0], [1], [0, 0, 1, 1], [], []>} : vector<2x128xf32>, vector<128x384xf32>, vector<2x384xf32> -> vector<2x384xf32>
    %167 = vector.extract_strided_slice %165 {offsets = [0, 0], sizes = [2, 128], strides = [1, 1]} : vector<2x384xf32> to vector<2x128xf32>
    %168 = vector.extract_strided_slice %166 {offsets = [0, 0], sizes = [2, 128], strides = [1, 1]} : vector<2x384xf32> to vector<2x128xf32>
    %169 = arith.addf %167, %168 : vector<2x128xf32>
    %170 = arith.negf %169 : vector<2x128xf32>
    %171 = math.exp %170 : vector<2x128xf32>
    %cst_50 = arith.constant 1.000000e+00 : f32
    %172 = vector.broadcast %cst_50 : f32 to vector<2x128xf32>
    %173 = arith.addf %172, %171 : vector<2x128xf32>
    %174 = arith.divf %172, %173 : vector<2x128xf32>
    %175 = vector.extract_strided_slice %165 {offsets = [0, 128], sizes = [2, 128], strides = [1, 1]} : vector<2x384xf32> to vector<2x128xf32>
    %176 = vector.extract_strided_slice %166 {offsets = [0, 128], sizes = [2, 128], strides = [1, 1]} : vector<2x384xf32> to vector<2x128xf32>
    %177 = arith.addf %175, %176 : vector<2x128xf32>
    %178 = arith.negf %177 : vector<2x128xf32>
    %179 = math.exp %178 : vector<2x128xf32>
    %cst_51 = arith.constant 1.000000e+00 : f32
    %180 = vector.broadcast %cst_51 : f32 to vector<2x128xf32>
    %181 = arith.addf %180, %179 : vector<2x128xf32>
    %182 = arith.divf %180, %181 : vector<2x128xf32>
    %183 = vector.extract_strided_slice %165 {offsets = [0, 256], sizes = [2, 128], strides = [1, 1]} : vector<2x384xf32> to vector<2x128xf32>
    %184 = vector.extract_strided_slice %166 {offsets = [0, 256], sizes = [2, 128], strides = [1, 1]} : vector<2x384xf32> to vector<2x128xf32>
    %185 = vector.broadcast %8 : vector<1x128xf32> to vector<2x128xf32>
    %186 = arith.addf %184, %185 : vector<2x128xf32>
    %187 = arith.mulf %174, %186 : vector<2x128xf32>
    %188 = arith.addf %183, %187 : vector<2x128xf32>
    %189 = math.tanh %188 : vector<2x128xf32>
    %cst_52 = arith.constant 1.000000e+00 : f32
    %190 = vector.broadcast %cst_52 : f32 to vector<2x128xf32>
    %191 = arith.subf %190, %182 : vector<2x128xf32>
    %192 = arith.mulf %191, %189 : vector<2x128xf32>
    %193 = arith.mulf %182, %163 : vector<2x128xf32>
    %194 = arith.addf %192, %193 : vector<2x128xf32>
    %c10_53 = arith.constant 10 : index
    %c0_54 = arith.constant 0 : index
    %195 = vector.load %arg9[%c10_53, %c0_54] : memref<16x128xf32, #tpu.memory_space<vmem>>, vector<2x128xf32>
    tpu.vector_store %arg9[%c10_53, %c0_54], %194 {strides = array<i32>} : memref<16x128xf32, #tpu.memory_space<vmem>>, vector<2x128xf32>,
    %c12 = arith.constant 12 : index
    %c0_55 = arith.constant 0 : index
    %196 = vector.load %arg8[%c12, %c0_55] : memref<16x384xf32, #tpu.memory_space<vmem>>, vector<2x384xf32>
    %cst_56 = arith.constant dense<0.000000e+00> : vector<2x384xf32>
    %197 = tpu.matmul %194, %7, %cst_56 {dimension_numbers = #tpu.dot_dimension_numbers<[1], [0], [0], [1], [0, 0, 1, 1], [], []>} : vector<2x128xf32>, vector<128x384xf32>, vector<2x384xf32> -> vector<2x384xf32>
    %198 = vector.extract_strided_slice %196 {offsets = [0, 0], sizes = [2, 128], strides = [1, 1]} : vector<2x384xf32> to vector<2x128xf32>
    %199 = vector.extract_strided_slice %197 {offsets = [0, 0], sizes = [2, 128], strides = [1, 1]} : vector<2x384xf32> to vector<2x128xf32>
    %200 = arith.addf %198, %199 : vector<2x128xf32>
    %201 = arith.negf %200 : vector<2x128xf32>
    %202 = math.exp %201 : vector<2x128xf32>
    %cst_57 = arith.constant 1.000000e+00 : f32
    %203 = vector.broadcast %cst_57 : f32 to vector<2x128xf32>
    %204 = arith.addf %203, %202 : vector<2x128xf32>
    %205 = arith.divf %203, %204 : vector<2x128xf32>
    %206 = vector.extract_strided_slice %196 {offsets = [0, 128], sizes = [2, 128], strides = [1, 1]} : vector<2x384xf32> to vector<2x128xf32>
    %207 = vector.extract_strided_slice %197 {offsets = [0, 128], sizes = [2, 128], strides = [1, 1]} : vector<2x384xf32> to vector<2x128xf32>
    %208 = arith.addf %206, %207 : vector<2x128xf32>
    %209 = arith.negf %208 : vector<2x128xf32>
    %210 = math.exp %209 : vector<2x128xf32>
    %cst_58 = arith.constant 1.000000e+00 : f32
    %211 = vector.broadcast %cst_58 : f32 to vector<2x128xf32>
    %212 = arith.addf %211, %210 : vector<2x128xf32>
    %213 = arith.divf %211, %212 : vector<2x128xf32>
    %214 = vector.extract_strided_slice %196 {offsets = [0, 256], sizes = [2, 128], strides = [1, 1]} : vector<2x384xf32> to vector<2x128xf32>
    %215 = vector.extract_strided_slice %197 {offsets = [0, 256], sizes = [2, 128], strides = [1, 1]} : vector<2x384xf32> to vector<2x128xf32>
    %216 = vector.broadcast %8 : vector<1x128xf32> to vector<2x128xf32>
    %217 = arith.addf %215, %216 : vector<2x128xf32>
    %218 = arith.mulf %205, %217 : vector<2x128xf32>
    %219 = arith.addf %214, %218 : vector<2x128xf32>
    %220 = math.tanh %219 : vector<2x128xf32>
    %cst_59 = arith.constant 1.000000e+00 : f32
    %221 = vector.broadcast %cst_59 : f32 to vector<2x128xf32>
    %222 = arith.subf %221, %213 : vector<2x128xf32>
    %223 = arith.mulf %222, %220 : vector<2x128xf32>
    %224 = arith.mulf %213, %194 : vector<2x128xf32>
    %225 = arith.addf %223, %224 : vector<2x128xf32>
    %c12_60 = arith.constant 12 : index
    %c0_61 = arith.constant 0 : index
    %226 = vector.load %arg9[%c12_60, %c0_61] : memref<16x128xf32, #tpu.memory_space<vmem>>, vector<2x128xf32>
    tpu.vector_store %arg9[%c12_60, %c0_61], %225 {strides = array<i32>} : memref<16x128xf32, #tpu.memory_space<vmem>>, vector<2x128xf32>,
    %c14 = arith.constant 14 : index
    %c0_62 = arith.constant 0 : index
    %227 = vector.load %arg8[%c14, %c0_62] : memref<16x384xf32, #tpu.memory_space<vmem>>, vector<2x384xf32>
    %cst_63 = arith.constant dense<0.000000e+00> : vector<2x384xf32>
    %228 = tpu.matmul %225, %7, %cst_63 {dimension_numbers = #tpu.dot_dimension_numbers<[1], [0], [0], [1], [0, 0, 1, 1], [], []>} : vector<2x128xf32>, vector<128x384xf32>, vector<2x384xf32> -> vector<2x384xf32>
    %229 = vector.extract_strided_slice %227 {offsets = [0, 0], sizes = [2, 128], strides = [1, 1]} : vector<2x384xf32> to vector<2x128xf32>
    %230 = vector.extract_strided_slice %228 {offsets = [0, 0], sizes = [2, 128], strides = [1, 1]} : vector<2x384xf32> to vector<2x128xf32>
    %231 = arith.addf %229, %230 : vector<2x128xf32>
    %232 = arith.negf %231 : vector<2x128xf32>
    %233 = math.exp %232 : vector<2x128xf32>
    %cst_64 = arith.constant 1.000000e+00 : f32
    %234 = vector.broadcast %cst_64 : f32 to vector<2x128xf32>
    %235 = arith.addf %234, %233 : vector<2x128xf32>
    %236 = arith.divf %234, %235 : vector<2x128xf32>
    %237 = vector.extract_strided_slice %227 {offsets = [0, 128], sizes = [2, 128], strides = [1, 1]} : vector<2x384xf32> to vector<2x128xf32>
    %238 = vector.extract_strided_slice %228 {offsets = [0, 128], sizes = [2, 128], strides = [1, 1]} : vector<2x384xf32> to vector<2x128xf32>
    %239 = arith.addf %237, %238 : vector<2x128xf32>
    %240 = arith.negf %239 : vector<2x128xf32>
    %241 = math.exp %240 : vector<2x128xf32>
    %cst_65 = arith.constant 1.000000e+00 : f32
    %242 = vector.broadcast %cst_65 : f32 to vector<2x128xf32>
    %243 = arith.addf %242, %241 : vector<2x128xf32>
    %244 = arith.divf %242, %243 : vector<2x128xf32>
    %245 = vector.extract_strided_slice %227 {offsets = [0, 256], sizes = [2, 128], strides = [1, 1]} : vector<2x384xf32> to vector<2x128xf32>
    %246 = vector.extract_strided_slice %228 {offsets = [0, 256], sizes = [2, 128], strides = [1, 1]} : vector<2x384xf32> to vector<2x128xf32>
    %247 = vector.broadcast %8 : vector<1x128xf32> to vector<2x128xf32>
    %248 = arith.addf %246, %247 : vector<2x128xf32>
    %249 = arith.mulf %236, %248 : vector<2x128xf32>
    %250 = arith.addf %245, %249 : vector<2x128xf32>
    %251 = math.tanh %250 : vector<2x128xf32>
    %cst_66 = arith.constant 1.000000e+00 : f32
    %252 = vector.broadcast %cst_66 : f32 to vector<2x128xf32>
    %253 = arith.subf %252, %244 : vector<2x128xf32>
    %254 = arith.mulf %253, %251 : vector<2x128xf32>
    %255 = arith.mulf %244, %225 : vector<2x128xf32>
    %256 = arith.addf %254, %255 : vector<2x128xf32>
    %c14_67 = arith.constant 14 : index
    %c0_68 = arith.constant 0 : index
    %257 = vector.load %arg9[%c14_67, %c0_68] : memref<16x128xf32, #tpu.memory_space<vmem>>, vector<2x128xf32>
    tpu.vector_store %arg9[%c14_67, %c0_68], %256 {strides = array<i32>} : memref<16x128xf32, #tpu.memory_space<vmem>>, vector<2x128xf32>,
    %c0_69 = arith.constant 0 : index
    %c0_70 = arith.constant 0 : index
    %258 = vector.load %arg9[%c0_69, %c0_70] : memref<16x128xf32, #tpu.memory_space<vmem>>, vector<16x128xf32>
    %c0_71 = arith.constant 0 : index
    %c0_72 = arith.constant 0 : index
    %259 = vector.load %arg5[%c0_71, %c0_72] : memref<128x128xf32, #tpu.memory_space<vmem>>, vector<128x128xf32>
    %cst_73 = arith.constant dense<0.000000e+00> : vector<16x128xf32>
    %260 = tpu.matmul %258, %259, %cst_73 {dimension_numbers = #tpu.dot_dimension_numbers<[1], [0], [0], [1], [0, 0, 1, 1], [], []>} : vector<16x128xf32>, vector<128x128xf32>, vector<16x128xf32> -> vector<16x128xf32>
    %c0_74 = arith.constant 0 : index
    %c0_75 = arith.constant 0 : index
    %261 = vector.load %arg6[%c0_74, %c0_75] : memref<1x128xf32, #tpu.memory_space<vmem>>, vector<1x128xf32>
    %262 = vector.broadcast %261 : vector<1x128xf32> to vector<16x128xf32>
    %263 = arith.addf %260, %262 : vector<16x128xf32>
    %264 = math.tanh %263 : vector<16x128xf32>
    %c0_76 = arith.constant 0 : index
    %c0_77 = arith.constant 0 : index
    %265 = vector.load %arg7[%c0_76, %c0_77] : memref<16x128xf32, #tpu.memory_space<vmem>>, vector<16x128xf32>
    tpu.vector_store %arg7[%c0_76, %c0_77], %264 {strides = array<i32>} : memref<16x128xf32, #tpu.memory_space<vmem>>, vector<16x128xf32>,
    return
  }
}

</mosaic_0001>

<llo_original>
// kernel: tpu_custom_call.1
$region0: #{tpu_custom_call.1}
  #allocation0 [shape = 'u32[]', space=smem, size = 0x4, offset = 0x4, fixed_abs, tag = 'smem constant byte address 0x4 - core index']
  #allocation1 [shape = 'u32[72,128]{1,0:T(1,128)}', space=vmem, size = 0x9000, scoped, tag = 'internal scratch']
  #allocation2 [shape = 'f32[16,384]{1,0:T(8,128)}', space=vmem, size = 0x6000, scoped, tag = 'scratch operand']
  #allocation3 [shape = 'f32[16,128]{1,0:T(8,128)}', space=vmem, size = 0x2000, scoped, tag = 'scratch operand']
  %s0 = inlined_call_operand.hbm [shape: f32[16,20], index: 0, kind: input, shape index: {}]
  %s1 = inlined_call_operand.hbm [shape: f32[20,384], index: 1, kind: input, shape index: {}]
  %s2 = inlined_call_operand.hbm [shape: f32[128,384], index: 2, kind: input, shape index: {}]
  %s3 = inlined_call_operand.hbm [shape: f32[1,384], index: 3, kind: input, shape index: {}]
  %s4 = inlined_call_operand.vmem [shape: f32[1,128], index: 4, kind: input, shape index: {}]
  %s5 = inlined_call_operand.hbm [shape: f32[128,128], index: 5, kind: input, shape index: {}]
  %s6 = inlined_call_operand.vmem [shape: f32[1,128], index: 6, kind: input, shape index: {}]
  %s7 = inlined_call_operand.hbm [shape: f32[16,128], index: 7, kind: output, shape index: {}]
  %s8 = sld [smem:[#allocation0]]
  $region58: #{tpu_custom_call.1} parent=0
    _
  %s10 = ssub.s32 1, %s8
  %s11 = scalar_select 0, %s10, %s8
  $region1: #{tpu_custom_call.1} parent=0
    #allocation4 [shape = 'u8[8192]{0}', space=vmem, size = 0x2000, scoped, tag = 'input window, operand 0, single buffered']
    #allocation5 [shape = 's32[1]{0}', space=sflag, size = 0x4, scoped, tag = 'scoped memory for tpu_custom_call.1']
    #allocation6 [shape = 's32[1]{0}', space=sflag, size = 0x4, scoped, tag = 'scoped memory for tpu_custom_call.1']
    #allocation7 [shape = 'u8[36864]{0}', space=vmem, size = 0x9000, scoped, tag = 'input window, operand 1, single buffered']
    #allocation8 [shape = 's32[1]{0}', space=sflag, size = 0x4, scoped, tag = 'scoped memory for tpu_custom_call.1']
    #allocation9 [shape = 'u8[196608]{0}', space=vmem, size = 0x30000, scoped, tag = 'input window, operand 2, single buffered']
    #allocation10 [shape = 'u8[1536]{0}', space=vmem, size = 0x800, scoped, tag = 'input window, operand 3, single buffered']
    #allocation11 [shape = 's32[1]{0}', space=sflag, size = 0x4, scoped, tag = 'scoped memory for tpu_custom_call.1']
    #allocation12 [shape = 'u8[65536]{0}', space=vmem, size = 0x10000, scoped, tag = 'input window, operand 5, single buffered']
    #allocation13 [shape = 'u8[8192]{0}', space=vmem, size = 0x2000, scoped, tag = 'output window, operand 0, single buffered']
    %12 = vsyncpa [#allocation5], 0
    %13 = vsyncpa [#allocation8], 0
    %14 = vsyncpa [#allocation11], 0
    %15 = vsyncpa [#allocation6], 0
    // Predicated region
    $region2: #{tpu_custom_call.1} parent=1 // pred_check
      _
    $region3: #{tpu_custom_call.1} parent=1 // pred_check_branch
      %17 = sbr.rel (0) target = $region5
    $region4: #{tpu_custom_call.1} parent=1 // pred_region
      %19 = vsyncadd [#allocation5], 0
      %s20 = sshll.u32 %s0, 4
      %s21 = int_to_ptr.hbm [resolvable:$true] %s20
      %s22 = sshll.u32 [#allocation4], 4
      %s23 = int_to_ptr.vmem [resolvable:$true] %s22
      %28 = dma.hbm_to_vmem [thread:$0]  %s21, 256, %s23, [#allocation5], 128, 128, 8
    $region5: #{tpu_custom_call.1} parent=1 // pred_fallthru
      _
    // Predicated region
    $region6: #{tpu_custom_call.1} parent=1 // pred_check
      _
    $region7: #{tpu_custom_call.1} parent=1 // pred_check_branch
      %30 = sbr.rel (0) target = $region9
    $region8: #{tpu_custom_call.1} parent=1 // pred_region
      %32 = vsyncadd [#allocation8], 0
      %s33 = sshll.u32 %s1, 4
      %s34 = int_to_ptr.hbm [resolvable:$true] %s33
      %s35 = sshll.u32 [#allocation7], 4
      %s36 = int_to_ptr.vmem [resolvable:$true] %s35
      %41 = dma.hbm_to_vmem [thread:$0]  %s34, 1152, %s36, [#allocation8], 384, 384, 24
    $region9: #{tpu_custom_call.1} parent=1 // pred_fallthru
      _
    // Predicated region
    $region10: #{tpu_custom_call.1} parent=1 // pred_check
      _
    $region11: #{tpu_custom_call.1} parent=1 // pred_check_branch
      %43 = sbr.rel (0) target = $region13
    $region12: #{tpu_custom_call.1} parent=1 // pred_region
      %45 = vsyncadd [#allocation8], 0
      %s46 = sshll.u32 %s2, 4
      %s47 = int_to_ptr.hbm [resolvable:$true] %s46
      %s48 = sshll.u32 [#allocation9], 4
      %s49 = int_to_ptr.vmem [resolvable:$true] %s48
      %54 = dma.hbm_to_vmem [thread:$0]  %s47, 6144, %s49, [#allocation8], 384, 384, 24
    $region13: #{tpu_custom_call.1} parent=1 // pred_fallthru
      _
    // Predicated region
    $region14: #{tpu_custom_call.1} parent=1 // pred_check
      _
    $region15: #{tpu_custom_call.1} parent=1 // pred_check_branch
      %56 = sbr.rel (0) target = $region17
    $region16: #{tpu_custom_call.1} parent=1 // pred_region
      %58 = vsyncadd [#allocation11], 0
      %s60 = sshll.u32 %s3, 4
      %s61 = int_to_ptr.hbm [resolvable:$true] %s60
      %s62 = sshll.u32 [#allocation10], 4
      %s63 = int_to_ptr.vmem [resolvable:$true] %s62
      %65 = dma.hbm_to_vmem [thread:$0]  %s61, 48, %s63, [#allocation11]
    $region17: #{tpu_custom_call.1} parent=1 // pred_fallthru
      _
    // Predicated region
    $region18: #{tpu_custom_call.1} parent=1 // pred_check
      _
    $region19: #{tpu_custom_call.1} parent=1 // pred_check_branch
      %67 = sbr.rel (0) target = $region21
    $region20: #{tpu_custom_call.1} parent=1 // pred_region
      _
    $region21: #{tpu_custom_call.1} parent=1 // pred_fallthru
      _
    // Predicated region
    $region22: #{tpu_custom_call.1} parent=1 // pred_check
      _
    $region23: #{tpu_custom_call.1} parent=1 // pred_check_branch
      %69 = sbr.rel (0) target = $region25
    $region24: #{tpu_custom_call.1} parent=1 // pred_region
      %71 = vsyncadd [#allocation11], 0
      %s72 = sshll.u32 %s5, 4
      %s73 = int_to_ptr.hbm [resolvable:$true] %s72
      %s74 = sshll.u32 [#allocation12], 4
      %s75 = int_to_ptr.vmem [resolvable:$true] %s74
      %80 = dma.hbm_to_vmem [thread:$0]  %s73, 2048, %s75, [#allocation11], 128, 128, 8
    $region25: #{tpu_custom_call.1} parent=1 // pred_fallthru
      _
    // Predicated region
    $region26: #{tpu_custom_call.1} parent=1 // pred_check
      _
    $region27: #{tpu_custom_call.1} parent=1 // pred_check_branch
      %82 = sbr.rel (0) target = $region29
    $region28: #{tpu_custom_call.1} parent=1 // pred_region
      _
    $region29: #{tpu_custom_call.1} parent=1 // pred_fallthru
      _
    // Predicated region
    $region30: #{tpu_custom_call.1} parent=1 // pred_check
      _
    $region31: #{tpu_custom_call.1} parent=1 // pred_check_branch
      %84 = sbr.rel (0) target = $region33
    $region32: #{tpu_custom_call.1} parent=1 // pred_region
      %86 = dma.done [#allocation5], 256
    $region33: #{tpu_custom_call.1} parent=1 // pred_fallthru
      _
    // Predicated region
    $region34: #{tpu_custom_call.1} parent=1 // pred_check
      _
    $region35: #{tpu_custom_call.1} parent=1 // pred_check_branch
      %88 = sbr.rel (0) target = $region37
    $region36: #{tpu_custom_call.1} parent=1 // pred_region
      %90 = dma.done [#allocation8], 1152
    $region37: #{tpu_custom_call.1} parent=1 // pred_fallthru
      _
    // Predicated region
    $region38: #{tpu_custom_call.1} parent=1 // pred_check
      _
    $region39: #{tpu_custom_call.1} parent=1 // pred_check_branch
      %92 = sbr.rel (0) target = $region41
    $region40: #{tpu_custom_call.1} parent=1 // pred_region
      %94 = dma.done [#allocation8], 6144
    $region41: #{tpu_custom_call.1} parent=1 // pred_fallthru
      _
    // Predicated region
    $region42: #{tpu_custom_call.1} parent=1 // pred_check
      _
    $region43: #{tpu_custom_call.1} parent=1 // pred_check_branch
      %96 = sbr.rel (0) target = $region45
    $region44: #{tpu_custom_call.1} parent=1 // pred_region
      %98 = dma.done [#allocation11], 48
    $region45: #{tpu_custom_call.1} parent=1 // pred_fallthru
      _
    // Predicated region
    $region46: #{tpu_custom_call.1} parent=1 // pred_check
      _
    $region47: #{tpu_custom_call.1} parent=1 // pred_check_branch
      %100 = sbr.rel (0) target = $region49
    $region48: #{tpu_custom_call.1} parent=1 // pred_region
      %102 = dma.done [#allocation11], 2048
    $region49: #{tpu_custom_call.1} parent=1 // pred_fallthru
      _
    %v103 = vld [vmem:[#allocation4] sm:$0xff]
    %v104 = vld [vmem:[#allocation4 + $0x8] sm:$0xff]
    %v105 = vld [vmem:[#allocation7] sm:$0xff]
    %v106 = vld [vmem:[#allocation7 + $0x8] sm:$0xff]
    %v107 = vld [vmem:[#allocation7 + $0x10] sm:$0xff]
    %v108 = vld [vmem:[#allocation7 + $0x18] sm:$0xff]
    %v109 = vld [vmem:[#allocation7 + $0x20] sm:$0xff]
    %v110 = vld [vmem:[#allocation7 + $0x28] sm:$0xff]
    %v111 = vld [vmem:[#allocation7 + $0x30] sm:$0xf]
    %v112 = vld [vmem:[#allocation7 + $0x38] sm:$0xf]
    %v113 = vld [vmem:[#allocation7 + $0x40] sm:$0xf]
    %v114 = vld [vmem:[#allocation10] sm:$0x7]
    %v116 = vperm.slane %v114, 0
    %v117 = vperm.slane %v114, 1
    %v118 = vperm.slane %v114, 2
    %vm122 = vcmask 162816
    %v124 = vsel %vm122, %v103, 0
    %v127 = vsel %vm122, %v104, 0
    %vm129 = vcmask 1043456
    %v131 = vsel %vm129, %v111, 0
    %v134 = vsel %vm129, %v112, 0
    %v137 = vsel %vm129, %v113, 0
    %139 = vmatpush.msra.mxu0 0.0
    %140 = vmatpush.msra.mxu0 0.0
    %141 = vmatpush.msra.mxu0 0.0
    %142 = vmatpush.msra.mxu0 0.0
    %143 = vmatpush.msra.mxu0 0.0
    %144 = vmatpush.msra.mxu0 0.0
    %145 = vmatpush.msra.mxu0 0.0
    %146 = vmatpush.msra.mxu0 0.0
    %147 = vmatpush.msra.mxu0 0.0
    %148 = vmatpush.msra.mxu0 0.0
    %149 = vmatpush.msra.mxu0 0.0
    %150 = vmatpush.msra.mxu0 0.0
    %151 = vmatpush.msra.mxu0 0.0
    %152 = vmatpush.msra.mxu0 %v131
    %153 = vmatpush.msra.mxu0 %v108
    %154 = vmatpush.msra.mxu0 %v105
    %155 = vmatmul.f32.gmra.mxu0 %v124
    %v156 = vpop.f32.mrf.mxu0
    %v157 = vadd.f32 %v116, %v156
    %158 = vmatmul.f32.gmra.mxu0 %v127
    %v159 = vpop.f32.mrf.mxu0
    %v160 = vadd.f32 %v116, %v159
    %161 = vdwg.mxu0
    %162 = vmatpush.msra.mxu0 0.0
    %163 = vmatpush.msra.mxu0 0.0
    %164 = vmatpush.msra.mxu0 0.0
    %165 = vmatpush.msra.mxu0 0.0
    %166 = vmatpush.msra.mxu0 0.0
    %167 = vmatpush.msra.mxu0 0.0
    %168 = vmatpush.msra.mxu0 0.0
    %169 = vmatpush.msra.mxu0 0.0
    %170 = vmatpush.msra.mxu0 0.0
    %171 = vmatpush.msra.mxu0 0.0
    %172 = vmatpush.msra.mxu0 0.0
    %173 = vmatpush.msra.mxu0 0.0
    %174 = vmatpush.msra.mxu0 0.0
    %175 = vmatpush.msra.mxu0 %v134
    %176 = vmatpush.msra.mxu0 %v109
    %177 = vmatpush.msra.mxu0 %v106
    %178 = vmatmul.f32.gmra.mxu0 %v124
    %v179 = vpop.f32.mrf.mxu0
    %v180 = vadd.f32 %v117, %v179
    %181 = vmatmul.f32.gmra.mxu0 %v127
    %v182 = vpop.f32.mrf.mxu0
    %v183 = vadd.f32 %v117, %v182
    %184 = vdwg.mxu0
    %185 = vmatpush.msra.mxu0 0.0
    %186 = vmatpush.msra.mxu0 0.0
    %187 = vmatpush.msra.mxu0 0.0
    %188 = vmatpush.msra.mxu0 0.0
    %189 = vmatpush.msra.mxu0 0.0
    %190 = vmatpush.msra.mxu0 0.0
    %191 = vmatpush.msra.mxu0 0.0
    %192 = vmatpush.msra.mxu0 0.0
    %193 = vmatpush.msra.mxu0 0.0
    %194 = vmatpush.msra.mxu0 0.0
    %195 = vmatpush.msra.mxu0 0.0
    %196 = vmatpush.msra.mxu0 0.0
    %197 = vmatpush.msra.mxu0 0.0
    %198 = vmatpush.msra.mxu0 %v137
    %199 = vmatpush.msra.mxu0 %v110
    %200 = vmatpush.msra.mxu0 %v107
    %201 = vmatmul.f32.gmra.mxu0 %v124
    %v202 = vpop.f32.mrf.mxu0
    %v203 = vadd.f32 %v118, %v202
    %204 = vmatmul.f32.gmra.mxu0 %v127
    %v205 = vpop.f32.mrf.mxu0
    %v206 = vadd.f32 %v118, %v205
    %207 = vdwg.mxu0
    %208 = vst [vmem:[#allocation2] sm:$0xff] %v157
    %209 = vst [vmem:[#allocation2 + $0x8] sm:$0xff] %v180
    %210 = vst [vmem:[#allocation2 + $0x10] sm:$0xff] %v203
    %211 = vst [vmem:[#allocation2 + $0x18] sm:$0xff] %v160
    %212 = vst [vmem:[#allocation2 + $0x20] sm:$0xff] %v183
    %213 = vst [vmem:[#allocation2 + $0x28] sm:$0xff] %v206
    %v214 = vld [vmem:[#allocation9] sm:$0xff]
    %v215 = vld [vmem:[#allocation9 + $0x8] sm:$0xff]
    %v216 = vld [vmem:[#allocation9 + $0x10] sm:$0xff]
    %v217 = vld [vmem:[#allocation9 + $0x18] sm:$0xff]
    %v218 = vld [vmem:[#allocation9 + $0x20] sm:$0xff]
    %v219 = vld [vmem:[#allocation9 + $0x28] sm:$0xff]
    %v220 = vld [vmem:[#allocation9 + $0x30] sm:$0xff]
    %v221 = vld [vmem:[#allocation9 + $0x38] sm:$0xff]
    %v222 = vld [vmem:[#allocation9 + $0x40] sm:$0xff]
    %v223 = vld [vmem:[#allocation9 + $0x48] sm:$0xff]
    %v224 = vld [vmem:[#allocation9 + $0x50] sm:$0xff]
    %v225 = vld [vmem:[#allocation9 + $0x58] sm:$0xff]
    %v226 = vld [vmem:[#allocation9 + $0x60] sm:$0xff]
    %v227 = vld [vmem:[#allocation9 + $0x68] sm:$0xff]
    %v228 = vld [vmem:[#allocation9 + $0x70] sm:$0xff]
    %v229 = vld [vmem:[#allocation9 + $0x78] sm:$0xff]
    %v230 = vld [vmem:[#allocation9 + $0x80] sm:$0xff]
    %v231 = vld [vmem:[#allocation9 + $0x88] sm:$0xff]
    %v232 = vld [vmem:[#allocation9 + $0x90] sm:$0xff]
    %v233 = vld [vmem:[#allocation9 + $0x98] sm:$0xff]
    %v234 = vld [vmem:[#allocation9 + $0xa0] sm:$0xff]
    %v235 = vld [vmem:[#allocation9 + $0xa8] sm:$0xff]
    %v236 = vld [vmem:[#allocation9 + $0xb0] sm:$0xff]
    %v237 = vld [vmem:[#allocation9 + $0xb8] sm:$0xff]
    %v238 = vld [vmem:[#allocation9 + $0xc0] sm:$0xff]
    %v239 = vld [vmem:[#allocation9 + $0xc8] sm:$0xff]
    %v240 = vld [vmem:[#allocation9 + $0xd0] sm:$0xff]
    %v241 = vld [vmem:[#allocation9 + $0xd8] sm:$0xff]
    %v242 = vld [vmem:[#allocation9 + $0xe0] sm:$0xff]
    %v243 = vld [vmem:[#allocation9 + $0xe8] sm:$0xff]
    %v244 = vld [vmem:[#allocation9 + $0xf0] sm:$0xff]
    %v245 = vld [vmem:[#allocation9 + $0xf8] sm:$0xff]
    %v246 = vld [vmem:[#allocation9 + $0x100] sm:$0xff]
    %v247 = vld [vmem:[#allocation9 + $0x108] sm:$0xff]
    %v248 = vld [vmem:[#allocation9 + $0x110] sm:$0xff]
    %v249 = vld [vmem:[#allocation9 + $0x118] sm:$0xff]
    %v250 = vld [vmem:[#allocation9 + $0x120] sm:$0xff]
    %v251 = vld [vmem:[#allocation9 + $0x128] sm:$0xff]
    %v252 = vld [vmem:[#allocation9 + $0x130] sm:$0xff]
    %v253 = vld [vmem:[#allocation9 + $0x138] sm:$0xff]
    %v254 = vld [vmem:[#allocation9 + $0x140] sm:$0xff]
    %v255 = vld [vmem:[#allocation9 + $0x148] sm:$0xff]
    %v256 = vld [vmem:[#allocation9 + $0x150] sm:$0xff]
    %v257 = vld [vmem:[#allocation9 + $0x158] sm:$0xff]
    %v258 = vld [vmem:[#allocation9 + $0x160] sm:$0xff]
    %v259 = vld [vmem:[#allocation9 + $0x168] sm:$0xff]
    %v260 = vld [vmem:[#allocation9 + $0x170] sm:$0xff]
    %v261 = vld [vmem:[#allocation9 + $0x178] sm:$0xff]
    %v262 = vld [vmem:[%s4] sm:$0x1]
    %v263 = vld [vmem:[#allocation2] sm:$0x3]
    %v264 = vld [vmem:[#allocation2 + $0x8] sm:$0x3]
    %v265 = vld [vmem:[#allocation2 + $0x10] sm:$0x3]
    %266 = vmatpush.msra.mxu0 %v259
    %267 = vmatpush.msra.mxu0 %v256
    %268 = vmatpush.msra.mxu0 %v253
    %269 = vmatpush.msra.mxu0 %v250
    %270 = vmatpush.msra.mxu0 %v247
    %271 = vmatpush.msra.mxu0 %v244
    %272 = vmatpush.msra.mxu0 %v241
    %273 = vmatpush.msra.mxu0 %v238
    %274 = vmatpush.msra.mxu0 %v235
    %275 = vmatpush.msra.mxu0 %v232
    %276 = vmatpush.msra.mxu0 %v229
    %277 = vmatpush.msra.mxu0 %v226
    %278 = vmatpush.msra.mxu0 %v223
    %279 = vmatpush.msra.mxu0 %v220
    %280 = vmatpush.msra.mxu0 %v217
    %281 = vmatpush.msra.mxu0 %v214
    %282 = vmatmul.f32.gmra.mxu0 0.0
    %v283 = vpop.f32.mrf.mxu0
    %v284 = vadd.f32 0.0, %v283
    %285 = vdwg.mxu0
    %286 = vmatpush.msra.mxu0 %v260
    %287 = vmatpush.msra.mxu0 %v257
    %288 = vmatpush.msra.mxu0 %v254
    %289 = vmatpush.msra.mxu0 %v251
    %290 = vmatpush.msra.mxu0 %v248
    %291 = vmatpush.msra.mxu0 %v245
    %292 = vmatpush.msra.mxu0 %v242
    %293 = vmatpush.msra.mxu0 %v239
    %294 = vmatpush.msra.mxu0 %v236
    %295 = vmatpush.msra.mxu0 %v233
    %296 = vmatpush.msra.mxu0 %v230
    %297 = vmatpush.msra.mxu0 %v227
    %298 = vmatpush.msra.mxu0 %v224
    %299 = vmatpush.msra.mxu0 %v221
    %300 = vmatpush.msra.mxu0 %v218
    %301 = vmatpush.msra.mxu0 %v215
    %302 = vmatmul.f32.gmra.mxu0 0.0
    %v303 = vpop.f32.mrf.mxu0
    %v304 = vadd.f32 0.0, %v303
    %305 = vdwg.mxu0
    %306 = vmatpush.msra.mxu0 %v261
    %307 = vmatpush.msra.mxu0 %v258
    %308 = vmatpush.msra.mxu0 %v255
    %309 = vmatpush.msra.mxu0 %v252
    %310 = vmatpush.msra.mxu0 %v249
    %311 = vmatpush.msra.mxu0 %v246
    %312 = vmatpush.msra.mxu0 %v243
    %313 = vmatpush.msra.mxu0 %v240
    %314 = vmatpush.msra.mxu0 %v237
    %315 = vmatpush.msra.mxu0 %v234
    %316 = vmatpush.msra.mxu0 %v231
    %317 = vmatpush.msra.mxu0 %v228
    %318 = vmatpush.msra.mxu0 %v225
    %319 = vmatpush.msra.mxu0 %v222
    %320 = vmatpush.msra.mxu0 %v219
    %321 = vmatpush.msra.mxu0 %v216
    %322 = vmatmul.f32.gmra.mxu0 0.0
    %v323 = vpop.f32.mrf.mxu0
    %v324 = vadd.f32 0.0, %v323
    %325 = vdwg.mxu0
    %v326 = vadd.f32 %v263, %v284
    %v327 = vxor.u32 %v326, 2147483648
    %v328 = vmul.f32 %v327, 1.442695
    %v329 = vpow.pop %v328
    %v330 = vadd.f32 %v329, 1.0
    %v331 = vrcp.pop %v330
    %v332 = vmul.f32 %v330, %v331
    %v333 = vsub.f32 1.0, %v332
    %v334 = vmul.f32 %v331, %v333
    %v335 = vadd.f32 %v331, %v334
    %vm336 = vweird.f32 %v330
    %vm337 = vweird.f32 %v331
    %vm338 = vmor %vm336, %vm337
    %v339 = vsel %vm338, %v331, %v335
    %v340 = vand.u32 2147483647, %v330
    %vm341 = vcmp.eq.f32.partialorder %v340, 8.507059e+37
    %v342 = vand.u32 %v330, 2147483648
    %v343 = vor.u32 1.1754944e-38, %v342
    %v344 = vsel %vm341, %v343, %v339
    %v345 = vmul.f32 1.0, %v344
    %v346 = vadd.f32 %v264, %v304
    %v347 = vxor.u32 %v346, 2147483648
    %v348 = vmul.f32 %v347, 1.442695
    %v349 = vpow.pop %v348
    %v350 = vadd.f32 %v349, 1.0
    %v351 = vrcp.pop %v350
    %v352 = vmul.f32 %v350, %v351
    %v353 = vsub.f32 1.0, %v352
    %v354 = vmul.f32 %v351, %v353
    %v355 = vadd.f32 %v351, %v354
    %vm356 = vweird.f32 %v350
    %vm357 = vweird.f32 %v351
    %vm358 = vmor %vm356, %vm357
    %v359 = vsel %vm358, %v351, %v355
    %v360 = vand.u32 2147483647, %v350
    %vm361 = vcmp.eq.f32.partialorder %v360, 8.507059e+37
    %v362 = vand.u32 %v350, 2147483648
    %v363 = vor.u32 1.1754944e-38, %v362
    %v364 = vsel %vm361, %v363, %v359
    %v365 = vmul.f32 1.0, %v364
    %v367 = vperm.slane %v262, 0
    %v369 = vadd.f32 %v324, %v367
    %v370 = vmul.f32 %v345, %v369
    %v371 = vadd.f32 %v265, %v370
    %v372 = vtanh.pop %v371
    %v373 = vsub.f32 1.0, %v365
    %v374 = vmul.f32 %v373, %v372
    %v375 = vmul.f32 %v365, 0.0
    %v376 = vadd.f32 %v374, %v375
    %377 = vst [vmem:[#allocation3] sm:$0x3] %v376
    %v378 = vld [vmem:[#allocation2] sm:$0xc]
    %v379 = vld [vmem:[#allocation2 + $0x8] sm:$0xc]
    %v380 = vld [vmem:[#allocation2 + $0x10] sm:$0xc]
    %381 = vmatpush.msra.mxu0 %v259
    %382 = vmatpush.msra.mxu0 %v256
    %383 = vmatpush.msra.mxu0 %v253
    %384 = vmatpush.msra.mxu0 %v250
    %385 = vmatpush.msra.mxu0 %v247
    %386 = vmatpush.msra.mxu0 %v244
    %387 = vmatpush.msra.mxu0 %v241
    %388 = vmatpush.msra.mxu0 %v238
    %389 = vmatpush.msra.mxu0 %v235
    %390 = vmatpush.msra.mxu0 %v232
    %391 = vmatpush.msra.mxu0 %v229
    %392 = vmatpush.msra.mxu0 %v226
    %393 = vmatpush.msra.mxu0 %v223
    %394 = vmatpush.msra.mxu0 %v220
    %395 = vmatpush.msra.mxu0 %v217
    %396 = vmatpush.msra.mxu0 %v214
    %397 = vmatmul.f32.gmra.mxu0 %v376
    %v398 = vpop.f32.mrf.mxu0
    %v399 = vadd.f32 0.0, %v398
    %400 = vdwg.mxu0
    %401 = vmatpush.msra.mxu0 %v260
    %402 = vmatpush.msra.mxu0 %v257
    %403 = vmatpush.msra.mxu0 %v254
    %404 = vmatpush.msra.mxu0 %v251
    %405 = vmatpush.msra.mxu0 %v248
    %406 = vmatpush.msra.mxu0 %v245
    %407 = vmatpush.msra.mxu0 %v242
    %408 = vmatpush.msra.mxu0 %v239
    %409 = vmatpush.msra.mxu0 %v236
    %410 = vmatpush.msra.mxu0 %v233
    %411 = vmatpush.msra.mxu0 %v230
    %412 = vmatpush.msra.mxu0 %v227
    %413 = vmatpush.msra.mxu0 %v224
    %414 = vmatpush.msra.mxu0 %v221
    %415 = vmatpush.msra.mxu0 %v218
    %416 = vmatpush.msra.mxu0 %v215
    %417 = vmatmul.f32.gmra.mxu0 %v376
    %v418 = vpop.f32.mrf.mxu0
    %v419 = vadd.f32 0.0, %v418
    %420 = vdwg.mxu0
    %421 = vmatpush.msra.mxu0 %v261
    %422 = vmatpush.msra.mxu0 %v258
    %423 = vmatpush.msra.mxu0 %v255
    %424 = vmatpush.msra.mxu0 %v252
    %425 = vmatpush.msra.mxu0 %v249
    %426 = vmatpush.msra.mxu0 %v246
    %427 = vmatpush.msra.mxu0 %v243
    %428 = vmatpush.msra.mxu0 %v240
    %429 = vmatpush.msra.mxu0 %v237
    %430 = vmatpush.msra.mxu0 %v234
    %431 = vmatpush.msra.mxu0 %v231
    %432 = vmatpush.msra.mxu0 %v228
    %433 = vmatpush.msra.mxu0 %v225
    %434 = vmatpush.msra.mxu0 %v222
    %435 = vmatpush.msra.mxu0 %v219
    %436 = vmatpush.msra.mxu0 %v216
    %437 = vmatmul.f32.gmra.mxu0 %v376
    %v438 = vpop.f32.mrf.mxu0
    %v439 = vadd.f32 0.0, %v438
    %440 = vdwg.mxu0
    %v442 = vrot.slane %v399, 6
    %v444 = vadd.f32 %v378, %v442
    %v445 = vxor.u32 %v444, 2147483648
    %v446 = vmul.f32 %v445, 1.442695
    %v447 = vpow.pop %v446
    %v448 = vadd.f32 %v447, 1.0
    %v449 = vrcp.pop %v448
    %v450 = vmul.f32 %v448, %v449
    %v451 = vsub.f32 1.0, %v450
    %v452 = vmul.f32 %v449, %v451
    %v453 = vadd.f32 %v449, %v452
    %vm454 = vweird.f32 %v448
    %vm455 = vweird.f32 %v449
    %vm456 = vmor %vm454, %vm455
    %v457 = vsel %vm456, %v449, %v453
    %v458 = vand.u32 2147483647, %v448
    %vm459 = vcmp.eq.f32.partialorder %v458, 8.507059e+37
    %v460 = vand.u32 %v448, 2147483648
    %v461 = vor.u32 1.1754944e-38, %v460
    %v462 = vsel %vm459, %v461, %v457
    %v463 = vmul.f32 1.0, %v462
    %v465 = vrot.slane %v419, 6
    %v467 = vadd.f32 %v379, %v465
    %v468 = vxor.u32 %v467, 2147483648
    %v469 = vmul.f32 %v468, 1.442695
    %v470 = vpow.pop %v469
    %v471 = vadd.f32 %v470, 1.0
    %v472 = vrcp.pop %v471
    %v473 = vmul.f32 %v471, %v472
    %v474 = vsub.f32 1.0, %v473
    %v475 = vmul.f32 %v472, %v474
    %v476 = vadd.f32 %v472, %v475
    %vm477 = vweird.f32 %v471
    %vm478 = vweird.f32 %v472
    %vm479 = vmor %vm477, %vm478
    %v480 = vsel %vm479, %v472, %v476
    %v481 = vand.u32 2147483647, %v471
    %vm482 = vcmp.eq.f32.partialorder %v481, 8.507059e+37
    %v483 = vand.u32 %v471, 2147483648
    %v484 = vor.u32 1.1754944e-38, %v483
    %v485 = vsel %vm482, %v484, %v480
    %v486 = vmul.f32 1.0, %v485
    %v487 = vadd.f32 %v439, %v367
    %v489 = vrot.slane %v487, 6
    %v491 = vmul.f32 %v463, %v489
    %v492 = vadd.f32 %v380, %v491
    %v493 = vtanh.pop %v492
    %v494 = vsub.f32 1.0, %v486
    %v495 = vmul.f32 %v494, %v493
    %v497 = vrot.slane %v376, 6
    %v499 = vmul.f32 %v486, %v497
    %v500 = vadd.f32 %v495, %v499
    %501 = vst [vmem:[#allocation3] sm:$0xc] %v500
    %v502 = vld [vmem:[#allocation2] sm:$0x30]
    %v503 = vld [vmem:[#allocation2 + $0x8] sm:$0x30]
    %v504 = vld [vmem:[#allocation2 + $0x10] sm:$0x30]
    %v506 = vrot.slane %v500, 2
    %508 = vmatpush.msra.mxu0 %v259
    %509 = vmatpush.msra.mxu0 %v256
    %510 = vmatpush.msra.mxu0 %v253
    %511 = vmatpush.msra.mxu0 %v250
    %512 = vmatpush.msra.mxu0 %v247
    %513 = vmatpush.msra.mxu0 %v244
    %514 = vmatpush.msra.mxu0 %v241
    %515 = vmatpush.msra.mxu0 %v238
    %516 = vmatpush.msra.mxu0 %v235
    %517 = vmatpush.msra.mxu0 %v232
    %518 = vmatpush.msra.mxu0 %v229
    %519 = vmatpush.msra.mxu0 %v226
    %520 = vmatpush.msra.mxu0 %v223
    %521 = vmatpush.msra.mxu0 %v220
    %522 = vmatpush.msra.mxu0 %v217
    %523 = vmatpush.msra.mxu0 %v214
    %524 = vmatmul.f32.gmra.mxu0 %v506
    %v525 = vpop.f32.mrf.mxu0
    %v526 = vadd.f32 0.0, %v525
    %527 = vdwg.mxu0
    %528 = vmatpush.msra.mxu0 %v260
    %529 = vmatpush.msra.mxu0 %v257
    %530 = vmatpush.msra.mxu0 %v254
    %531 = vmatpush.msra.mxu0 %v251
    %532 = vmatpush.msra.mxu0 %v248
    %533 = vmatpush.msra.mxu0 %v245
    %534 = vmatpush.msra.mxu0 %v242
    %535 = vmatpush.msra.mxu0 %v239
    %536 = vmatpush.msra.mxu0 %v236
    %537 = vmatpush.msra.mxu0 %v233
    %538 = vmatpush.msra.mxu0 %v230
    %539 = vmatpush.msra.mxu0 %v227
    %540 = vmatpush.msra.mxu0 %v224
    %541 = vmatpush.msra.mxu0 %v221
    %542 = vmatpush.msra.mxu0 %v218
    %543 = vmatpush.msra.mxu0 %v215
    %544 = vmatmul.f32.gmra.mxu0 %v506
    %v545 = vpop.f32.mrf.mxu0
    %v546 = vadd.f32 0.0, %v545
    %547 = vdwg.mxu0
    %548 = vmatpush.msra.mxu0 %v261
    %549 = vmatpush.msra.mxu0 %v258
    %550 = vmatpush.msra.mxu0 %v255
    %551 = vmatpush.msra.mxu0 %v252
    %552 = vmatpush.msra.mxu0 %v249
    %553 = vmatpush.msra.mxu0 %v246
    %554 = vmatpush.msra.mxu0 %v243
    %555 = vmatpush.msra.mxu0 %v240
    %556 = vmatpush.msra.mxu0 %v237
    %557 = vmatpush.msra.mxu0 %v234
    %558 = vmatpush.msra.mxu0 %v231
    %559 = vmatpush.msra.mxu0 %v228
    %560 = vmatpush.msra.mxu0 %v225
    %561 = vmatpush.msra.mxu0 %v222
    %562 = vmatpush.msra.mxu0 %v219
    %563 = vmatpush.msra.mxu0 %v216
    %564 = vmatmul.f32.gmra.mxu0 %v506
    %v565 = vpop.f32.mrf.mxu0
    %v566 = vadd.f32 0.0, %v565
    %567 = vdwg.mxu0
    %v569 = vrot.slane %v526, 4
    %v571 = vadd.f32 %v502, %v569
    %v572 = vxor.u32 %v571, 2147483648
    %v573 = vmul.f32 %v572, 1.442695
    %v574 = vpow.pop %v573
    %v575 = vadd.f32 %v574, 1.0
    %v576 = vrcp.pop %v575
    %v577 = vmul.f32 %v575, %v576
    %v578 = vsub.f32 1.0, %v577
    %v579 = vmul.f32 %v576, %v578
    %v580 = vadd.f32 %v576, %v579
    %vm581 = vweird.f32 %v575
    %vm582 = vweird.f32 %v576
    %vm583 = vmor %vm581, %vm582
    %v584 = vsel %vm583, %v576, %v580
    %v585 = vand.u32 2147483647, %v575
    %vm586 = vcmp.eq.f32.partialorder %v585, 8.507059e+37
    %v587 = vand.u32 %v575, 2147483648
    %v588 = vor.u32 1.1754944e-38, %v587
    %v589 = vsel %vm586, %v588, %v584
    %v590 = vmul.f32 1.0, %v589
    %v592 = vrot.slane %v546, 4
    %v594 = vadd.f32 %v503, %v592
    %v595 = vxor.u32 %v594, 2147483648
    %v596 = vmul.f32 %v595, 1.442695
    %v597 = vpow.pop %v596
    %v598 = vadd.f32 %v597, 1.0
    %v599 = vrcp.pop %v598
    %v600 = vmul.f32 %v598, %v599
    %v601 = vsub.f32 1.0, %v600
    %v602 = vmul.f32 %v599, %v601
    %v603 = vadd.f32 %v599, %v602
    %vm604 = vweird.f32 %v598
    %vm605 = vweird.f32 %v599
    %vm606 = vmor %vm604, %vm605
    %v607 = vsel %vm606, %v599, %v603
    %v608 = vand.u32 2147483647, %v598
    %vm609 = vcmp.eq.f32.partialorder %v608, 8.507059e+37
    %v610 = vand.u32 %v598, 2147483648
    %v611 = vor.u32 1.1754944e-38, %v610
    %v612 = vsel %vm609, %v611, %v607
    %v613 = vmul.f32 1.0, %v612
    %v614 = vadd.f32 %v566, %v367
    %v616 = vrot.slane %v614, 4
    %v618 = vmul.f32 %v590, %v616
    %v619 = vadd.f32 %v504, %v618
    %v620 = vtanh.pop %v619
    %v621 = vsub.f32 1.0, %v613
    %v622 = vmul.f32 %v621, %v620
    %v623 = vrot.slane %v500, 6
    %v625 = vmul.f32 %v613, %v623
    %v626 = vadd.f32 %v622, %v625
    %627 = vst [vmem:[#allocation3] sm:$0x30] %v626
    %v628 = vld [vmem:[#allocation2] sm:$0xc0]
    %v629 = vld [vmem:[#allocation2 + $0x8] sm:$0xc0]
    %v630 = vld [vmem:[#allocation2 + $0x10] sm:$0xc0]
    %v632 = vrot.slane %v626, 4
    %634 = vmatpush.msra.mxu0 %v259
    %635 = vmatpush.msra.mxu0 %v256
    %636 = vmatpush.msra.mxu0 %v253
    %637 = vmatpush.msra.mxu0 %v250
    %638 = vmatpush.msra.mxu0 %v247
    %639 = vmatpush.msra.mxu0 %v244
    %640 = vmatpush.msra.mxu0 %v241
    %641 = vmatpush.msra.mxu0 %v238
    %642 = vmatpush.msra.mxu0 %v235
    %643 = vmatpush.msra.mxu0 %v232
    %644 = vmatpush.msra.mxu0 %v229
    %645 = vmatpush.msra.mxu0 %v226
    %646 = vmatpush.msra.mxu0 %v223
    %647 = vmatpush.msra.mxu0 %v220
    %648 = vmatpush.msra.mxu0 %v217
    %649 = vmatpush.msra.mxu0 %v214
    %650 = vmatmul.f32.gmra.mxu0 %v632
    %v651 = vpop.f32.mrf.mxu0
    %v652 = vadd.f32 0.0, %v651
    %653 = vdwg.mxu0
    %654 = vmatpush.msra.mxu0 %v260
    %655 = vmatpush.msra.mxu0 %v257
    %656 = vmatpush.msra.mxu0 %v254
    %657 = vmatpush.msra.mxu0 %v251
    %658 = vmatpush.msra.mxu0 %v248
    %659 = vmatpush.msra.mxu0 %v245
    %660 = vmatpush.msra.mxu0 %v242
    %661 = vmatpush.msra.mxu0 %v239
    %662 = vmatpush.msra.mxu0 %v236
    %663 = vmatpush.msra.mxu0 %v233
    %664 = vmatpush.msra.mxu0 %v230
    %665 = vmatpush.msra.mxu0 %v227
    %666 = vmatpush.msra.mxu0 %v224
    %667 = vmatpush.msra.mxu0 %v221
    %668 = vmatpush.msra.mxu0 %v218
    %669 = vmatpush.msra.mxu0 %v215
    %670 = vmatmul.f32.gmra.mxu0 %v632
    %v671 = vpop.f32.mrf.mxu0
    %v672 = vadd.f32 0.0, %v671
    %673 = vdwg.mxu0
    %674 = vmatpush.msra.mxu0 %v261
    %675 = vmatpush.msra.mxu0 %v258
    %676 = vmatpush.msra.mxu0 %v255
    %677 = vmatpush.msra.mxu0 %v252
    %678 = vmatpush.msra.mxu0 %v249
    %679 = vmatpush.msra.mxu0 %v246
    %680 = vmatpush.msra.mxu0 %v243
    %681 = vmatpush.msra.mxu0 %v240
    %682 = vmatpush.msra.mxu0 %v237
    %683 = vmatpush.msra.mxu0 %v234
    %684 = vmatpush.msra.mxu0 %v231
    %685 = vmatpush.msra.mxu0 %v228
    %686 = vmatpush.msra.mxu0 %v225
    %687 = vmatpush.msra.mxu0 %v222
    %688 = vmatpush.msra.mxu0 %v219
    %689 = vmatpush.msra.mxu0 %v216
    %690 = vmatmul.f32.gmra.mxu0 %v632
    %v691 = vpop.f32.mrf.mxu0
    %v692 = vadd.f32 0.0, %v691
    %693 = vdwg.mxu0
    %v695 = vrot.slane %v652, 2
    %v697 = vadd.f32 %v628, %v695
    %v698 = vxor.u32 %v697, 2147483648
    %v699 = vmul.f32 %v698, 1.442695
    %v700 = vpow.pop %v699
    %v701 = vadd.f32 %v700, 1.0
    %v702 = vrcp.pop %v701
    %v703 = vmul.f32 %v701, %v702
    %v704 = vsub.f32 1.0, %v703
    %v705 = vmul.f32 %v702, %v704
    %v706 = vadd.f32 %v702, %v705
    %vm707 = vweird.f32 %v701
    %vm708 = vweird.f32 %v702
    %vm709 = vmor %vm707, %vm708
    %v710 = vsel %vm709, %v702, %v706
    %v711 = vand.u32 2147483647, %v701
    %vm712 = vcmp.eq.f32.partialorder %v711, 8.507059e+37
    %v713 = vand.u32 %v701, 2147483648
    %v714 = vor.u32 1.1754944e-38, %v713
    %v715 = vsel %vm712, %v714, %v710
    %v716 = vmul.f32 1.0, %v715
    %v718 = vrot.slane %v672, 2
    %v720 = vadd.f32 %v629, %v718
    %v721 = vxor.u32 %v720, 2147483648
    %v722 = vmul.f32 %v721, 1.442695
    %v723 = vpow.pop %v722
    %v724 = vadd.f32 %v723, 1.0
    %v725 = vrcp.pop %v724
    %v726 = vmul.f32 %v724, %v725
    %v727 = vsub.f32 1.0, %v726
    %v728 = vmul.f32 %v725, %v727
    %v729 = vadd.f32 %v725, %v728
    %vm730 = vweird.f32 %v724
    %vm731 = vweird.f32 %v725
    %vm732 = vmor %vm730, %vm731
    %v733 = vsel %vm732, %v725, %v729
    %v734 = vand.u32 2147483647, %v724
    %vm735 = vcmp.eq.f32.partialorder %v734, 8.507059e+37
    %v736 = vand.u32 %v724, 2147483648
    %v737 = vor.u32 1.1754944e-38, %v736
    %v738 = vsel %vm735, %v737, %v733
    %v739 = vmul.f32 1.0, %v738
    %v740 = vadd.f32 %v692, %v367
    %v742 = vrot.slane %v740, 2
    %v744 = vmul.f32 %v716, %v742
    %v745 = vadd.f32 %v630, %v744
    %v746 = vtanh.pop %v745
    %v747 = vsub.f32 1.0, %v739
    %v748 = vmul.f32 %v747, %v746
    %v749 = vrot.slane %v626, 6
    %v751 = vmul.f32 %v739, %v749
    %v752 = vadd.f32 %v748, %v751
    %753 = vst [vmem:[#allocation3] sm:$0xc0] %v752
    %v754 = vld [vmem:[#allocation2 + $0x18] sm:$0x3]
    %v755 = vld [vmem:[#allocation2 + $0x20] sm:$0x3]
    %v756 = vld [vmem:[#allocation2 + $0x28] sm:$0x3]
    %v758 = vrot.slane %v752, 6
    %760 = vmatpush.msra.mxu0 %v259
    %761 = vmatpush.msra.mxu0 %v256
    %762 = vmatpush.msra.mxu0 %v253
    %763 = vmatpush.msra.mxu0 %v250
    %764 = vmatpush.msra.mxu0 %v247
    %765 = vmatpush.msra.mxu0 %v244
    %766 = vmatpush.msra.mxu0 %v241
    %767 = vmatpush.msra.mxu0 %v238
    %768 = vmatpush.msra.mxu0 %v235
    %769 = vmatpush.msra.mxu0 %v232
    %770 = vmatpush.msra.mxu0 %v229
    %771 = vmatpush.msra.mxu0 %v226
    %772 = vmatpush.msra.mxu0 %v223
    %773 = vmatpush.msra.mxu0 %v220
    %774 = vmatpush.msra.mxu0 %v217
    %775 = vmatpush.msra.mxu0 %v214
    %776 = vmatmul.f32.gmra.mxu0 %v758
    %v777 = vpop.f32.mrf.mxu0
    %v778 = vadd.f32 0.0, %v777
    %779 = vdwg.mxu0
    %780 = vmatpush.msra.mxu0 %v260
    %781 = vmatpush.msra.mxu0 %v257
    %782 = vmatpush.msra.mxu0 %v254
    %783 = vmatpush.msra.mxu0 %v251
    %784 = vmatpush.msra.mxu0 %v248
    %785 = vmatpush.msra.mxu0 %v245
    %786 = vmatpush.msra.mxu0 %v242
    %787 = vmatpush.msra.mxu0 %v239
    %788 = vmatpush.msra.mxu0 %v236
    %789 = vmatpush.msra.mxu0 %v233
    %790 = vmatpush.msra.mxu0 %v230
    %791 = vmatpush.msra.mxu0 %v227
    %792 = vmatpush.msra.mxu0 %v224
    %793 = vmatpush.msra.mxu0 %v221
    %794 = vmatpush.msra.mxu0 %v218
    %795 = vmatpush.msra.mxu0 %v215
    %796 = vmatmul.f32.gmra.mxu0 %v758
    %v797 = vpop.f32.mrf.mxu0
    %v798 = vadd.f32 0.0, %v797
    %799 = vdwg.mxu0
    %800 = vmatpush.msra.mxu0 %v261
    %801 = vmatpush.msra.mxu0 %v258
    %802 = vmatpush.msra.mxu0 %v255
    %803 = vmatpush.msra.mxu0 %v252
    %804 = vmatpush.msra.mxu0 %v249
    %805 = vmatpush.msra.mxu0 %v246
    %806 = vmatpush.msra.mxu0 %v243
    %807 = vmatpush.msra.mxu0 %v240
    %808 = vmatpush.msra.mxu0 %v237
    %809 = vmatpush.msra.mxu0 %v234
    %810 = vmatpush.msra.mxu0 %v231
    %811 = vmatpush.msra.mxu0 %v228
    %812 = vmatpush.msra.mxu0 %v225
    %813 = vmatpush.msra.mxu0 %v222
    %814 = vmatpush.msra.mxu0 %v219
    %815 = vmatpush.msra.mxu0 %v216
    %816 = vmatmul.f32.gmra.mxu0 %v758
    %v817 = vpop.f32.mrf.mxu0
    %v818 = vadd.f32 0.0, %v817
    %819 = vdwg.mxu0
    %v820 = vadd.f32 %v754, %v778
    %v821 = vxor.u32 %v820, 2147483648
    %v822 = vmul.f32 %v821, 1.442695
    %v823 = vpow.pop %v822
    %v824 = vadd.f32 %v823, 1.0
    %v825 = vrcp.pop %v824
    %v826 = vmul.f32 %v824, %v825
    %v827 = vsub.f32 1.0, %v826
    %v828 = vmul.f32 %v825, %v827
    %v829 = vadd.f32 %v825, %v828
    %vm830 = vweird.f32 %v824
    %vm831 = vweird.f32 %v825
    %vm832 = vmor %vm830, %vm831
    %v833 = vsel %vm832, %v825, %v829
    %v834 = vand.u32 2147483647, %v824
    %vm835 = vcmp.eq.f32.partialorder %v834, 8.507059e+37
    %v836 = vand.u32 %v824, 2147483648
    %v837 = vor.u32 1.1754944e-38, %v836
    %v838 = vsel %vm835, %v837, %v833
    %v839 = vmul.f32 1.0, %v838
    %v840 = vadd.f32 %v755, %v798
    %v841 = vxor.u32 %v840, 2147483648
    %v842 = vmul.f32 %v841, 1.442695
    %v843 = vpow.pop %v842
    %v844 = vadd.f32 %v843, 1.0
    %v845 = vrcp.pop %v844
    %v846 = vmul.f32 %v844, %v845
    %v847 = vsub.f32 1.0, %v846
    %v848 = vmul.f32 %v845, %v847
    %v849 = vadd.f32 %v845, %v848
    %vm850 = vweird.f32 %v844
    %vm851 = vweird.f32 %v845
    %vm852 = vmor %vm850, %vm851
    %v853 = vsel %vm852, %v845, %v849
    %v854 = vand.u32 2147483647, %v844
    %vm855 = vcmp.eq.f32.partialorder %v854, 8.507059e+37
    %v856 = vand.u32 %v844, 2147483648
    %v857 = vor.u32 1.1754944e-38, %v856
    %v858 = vsel %vm855, %v857, %v853
    %v859 = vmul.f32 1.0, %v858
    %v860 = vadd.f32 %v818, %v367
    %v861 = vmul.f32 %v839, %v860
    %v862 = vadd.f32 %v756, %v861
    %v863 = vtanh.pop %v862
    %v864 = vsub.f32 1.0, %v859
    %v865 = vmul.f32 %v864, %v863
    %v866 = vmul.f32 %v859, %v758
    %v867 = vadd.f32 %v865, %v866
    %868 = vst [vmem:[#allocation3 + $0x8] sm:$0x3] %v867
    %v869 = vld [vmem:[#allocation2 + $0x18] sm:$0xc]
    %v870 = vld [vmem:[#allocation2 + $0x20] sm:$0xc]
    %v871 = vld [vmem:[#allocation2 + $0x28] sm:$0xc]
    %872 = vmatpush.msra.mxu0 %v259
    %873 = vmatpush.msra.mxu0 %v256
    %874 = vmatpush.msra.mxu0 %v253
    %875 = vmatpush.msra.mxu0 %v250
    %876 = vmatpush.msra.mxu0 %v247
    %877 = vmatpush.msra.mxu0 %v244
    %878 = vmatpush.msra.mxu0 %v241
    %879 = vmatpush.msra.mxu0 %v238
    %880 = vmatpush.msra.mxu0 %v235
    %881 = vmatpush.msra.mxu0 %v232
    %882 = vmatpush.msra.mxu0 %v229
    %883 = vmatpush.msra.mxu0 %v226
    %884 = vmatpush.msra.mxu0 %v223
    %885 = vmatpush.msra.mxu0 %v220
    %886 = vmatpush.msra.mxu0 %v217
    %887 = vmatpush.msra.mxu0 %v214
    %888 = vmatmul.f32.gmra.mxu0 %v867
    %v889 = vpop.f32.mrf.mxu0
    %v890 = vadd.f32 0.0, %v889
    %891 = vdwg.mxu0
    %892 = vmatpush.msra.mxu0 %v260
    %893 = vmatpush.msra.mxu0 %v257
    %894 = vmatpush.msra.mxu0 %v254
    %895 = vmatpush.msra.mxu0 %v251
    %896 = vmatpush.msra.mxu0 %v248
    %897 = vmatpush.msra.mxu0 %v245
    %898 = vmatpush.msra.mxu0 %v242
    %899 = vmatpush.msra.mxu0 %v239
    %900 = vmatpush.msra.mxu0 %v236
    %901 = vmatpush.msra.mxu0 %v233
    %902 = vmatpush.msra.mxu0 %v230
    %903 = vmatpush.msra.mxu0 %v227
    %904 = vmatpush.msra.mxu0 %v224
    %905 = vmatpush.msra.mxu0 %v221
    %906 = vmatpush.msra.mxu0 %v218
    %907 = vmatpush.msra.mxu0 %v215
    %908 = vmatmul.f32.gmra.mxu0 %v867
    %v909 = vpop.f32.mrf.mxu0
    %v910 = vadd.f32 0.0, %v909
    %911 = vdwg.mxu0
    %912 = vmatpush.msra.mxu0 %v261
    %913 = vmatpush.msra.mxu0 %v258
    %914 = vmatpush.msra.mxu0 %v255
    %915 = vmatpush.msra.mxu0 %v252
    %916 = vmatpush.msra.mxu0 %v249
    %917 = vmatpush.msra.mxu0 %v246
    %918 = vmatpush.msra.mxu0 %v243
    %919 = vmatpush.msra.mxu0 %v240
    %920 = vmatpush.msra.mxu0 %v237
    %921 = vmatpush.msra.mxu0 %v234
    %922 = vmatpush.msra.mxu0 %v231
    %923 = vmatpush.msra.mxu0 %v228
    %924 = vmatpush.msra.mxu0 %v225
    %925 = vmatpush.msra.mxu0 %v222
    %926 = vmatpush.msra.mxu0 %v219
    %927 = vmatpush.msra.mxu0 %v216
    %928 = vmatmul.f32.gmra.mxu0 %v867
    %v929 = vpop.f32.mrf.mxu0
    %v930 = vadd.f32 0.0, %v929
    %931 = vdwg.mxu0
    %v933 = vrot.slane %v890, 6
    %v935 = vadd.f32 %v869, %v933
    %v936 = vxor.u32 %v935, 2147483648
    %v937 = vmul.f32 %v936, 1.442695
    %v938 = vpow.pop %v937
    %v939 = vadd.f32 %v938, 1.0
    %v940 = vrcp.pop %v939
    %v941 = vmul.f32 %v939, %v940
    %v942 = vsub.f32 1.0, %v941
    %v943 = vmul.f32 %v940, %v942
    %v944 = vadd.f32 %v940, %v943
    %vm945 = vweird.f32 %v939
    %vm946 = vweird.f32 %v940
    %vm947 = vmor %vm945, %vm946
    %v948 = vsel %vm947, %v940, %v944
    %v949 = vand.u32 2147483647, %v939
    %vm950 = vcmp.eq.f32.partialorder %v949, 8.507059e+37
    %v951 = vand.u32 %v939, 2147483648
    %v952 = vor.u32 1.1754944e-38, %v951
    %v953 = vsel %vm950, %v952, %v948
    %v954 = vmul.f32 1.0, %v953
    %v956 = vrot.slane %v910, 6
    %v958 = vadd.f32 %v870, %v956
    %v959 = vxor.u32 %v958, 2147483648
    %v960 = vmul.f32 %v959, 1.442695
    %v961 = vpow.pop %v960
    %v962 = vadd.f32 %v961, 1.0
    %v963 = vrcp.pop %v962
    %v964 = vmul.f32 %v962, %v963
    %v965 = vsub.f32 1.0, %v964
    %v966 = vmul.f32 %v963, %v965
    %v967 = vadd.f32 %v963, %v966
    %vm968 = vweird.f32 %v962
    %vm969 = vweird.f32 %v963
    %vm970 = vmor %vm968, %vm969
    %v971 = vsel %vm970, %v963, %v967
    %v972 = vand.u32 2147483647, %v962
    %vm973 = vcmp.eq.f32.partialorder %v972, 8.507059e+37
    %v974 = vand.u32 %v962, 2147483648
    %v975 = vor.u32 1.1754944e-38, %v974
    %v976 = vsel %vm973, %v975, %v971
    %v977 = vmul.f32 1.0, %v976
    %v978 = vadd.f32 %v930, %v367
    %v980 = vrot.slane %v978, 6
    %v982 = vmul.f32 %v954, %v980
    %v983 = vadd.f32 %v871, %v982
    %v984 = vtanh.pop %v983
    %v985 = vsub.f32 1.0, %v977
    %v986 = vmul.f32 %v985, %v984
    %v988 = vrot.slane %v867, 6
    %v990 = vmul.f32 %v977, %v988
    %v991 = vadd.f32 %v986, %v990
    %992 = vst [vmem:[#allocation3 + $0x8] sm:$0xc] %v991
    %v993 = vld [vmem:[#allocation2 + $0x18] sm:$0x30]
    %v994 = vld [vmem:[#allocation2 + $0x20] sm:$0x30]
    %v995 = vld [vmem:[#allocation2 + $0x28] sm:$0x30]
    %v997 = vrot.slane %v991, 2
    %999 = vmatpush.msra.mxu0 %v259
    %1000 = vmatpush.msra.mxu0 %v256
    %1001 = vmatpush.msra.mxu0 %v253
    %1002 = vmatpush.msra.mxu0 %v250
    %1003 = vmatpush.msra.mxu0 %v247
    %1004 = vmatpush.msra.mxu0 %v244
    %1005 = vmatpush.msra.mxu0 %v241
    %1006 = vmatpush.msra.mxu0 %v238
    %1007 = vmatpush.msra.mxu0 %v235
    %1008 = vmatpush.msra.mxu0 %v232
    %1009 = vmatpush.msra.mxu0 %v229
    %1010 = vmatpush.msra.mxu0 %v226
    %1011 = vmatpush.msra.mxu0 %v223
    %1012 = vmatpush.msra.mxu0 %v220
    %1013 = vmatpush.msra.mxu0 %v217
    %1014 = vmatpush.msra.mxu0 %v214
    %1015 = vmatmul.f32.gmra.mxu0 %v997
    %v1016 = vpop.f32.mrf.mxu0
    %v1017 = vadd.f32 0.0, %v1016
    %1018 = vdwg.mxu0
    %1019 = vmatpush.msra.mxu0 %v260
    %1020 = vmatpush.msra.mxu0 %v257
    %1021 = vmatpush.msra.mxu0 %v254
    %1022 = vmatpush.msra.mxu0 %v251
    %1023 = vmatpush.msra.mxu0 %v248
    %1024 = vmatpush.msra.mxu0 %v245
    %1025 = vmatpush.msra.mxu0 %v242
    %1026 = vmatpush.msra.mxu0 %v239
    %1027 = vmatpush.msra.mxu0 %v236
    %1028 = vmatpush.msra.mxu0 %v233
    %1029 = vmatpush.msra.mxu0 %v230
    %1030 = vmatpush.msra.mxu0 %v227
    %1031 = vmatpush.msra.mxu0 %v224
    %1032 = vmatpush.msra.mxu0 %v221
    %1033 = vmatpush.msra.mxu0 %v218
    %1034 = vmatpush.msra.mxu0 %v215
    %1035 = vmatmul.f32.gmra.mxu0 %v997
    %v1036 = vpop.f32.mrf.mxu0
    %v1037 = vadd.f32 0.0, %v1036
    %1038 = vdwg.mxu0
    %1039 = vmatpush.msra.mxu0 %v261
    %1040 = vmatpush.msra.mxu0 %v258
    %1041 = vmatpush.msra.mxu0 %v255
    %1042 = vmatpush.msra.mxu0 %v252
    %1043 = vmatpush.msra.mxu0 %v249
    %1044 = vmatpush.msra.mxu0 %v246
    %1045 = vmatpush.msra.mxu0 %v243
    %1046 = vmatpush.msra.mxu0 %v240
    %1047 = vmatpush.msra.mxu0 %v237
    %1048 = vmatpush.msra.mxu0 %v234
    %1049 = vmatpush.msra.mxu0 %v231
    %1050 = vmatpush.msra.mxu0 %v228
    %1051 = vmatpush.msra.mxu0 %v225
    %1052 = vmatpush.msra.mxu0 %v222
    %1053 = vmatpush.msra.mxu0 %v219
    %1054 = vmatpush.msra.mxu0 %v216
    %1055 = vmatmul.f32.gmra.mxu0 %v997
    %v1056 = vpop.f32.mrf.mxu0
    %v1057 = vadd.f32 0.0, %v1056
    %1058 = vdwg.mxu0
    %v1060 = vrot.slane %v1017, 4
    %v1062 = vadd.f32 %v993, %v1060
    %v1063 = vxor.u32 %v1062, 2147483648
    %v1064 = vmul.f32 %v1063, 1.442695
    %v1065 = vpow.pop %v1064
    %v1066 = vadd.f32 %v1065, 1.0
    %v1067 = vrcp.pop %v1066
    %v1068 = vmul.f32 %v1066, %v1067
    %v1069 = vsub.f32 1.0, %v1068
    %v1070 = vmul.f32 %v1067, %v1069
    %v1071 = vadd.f32 %v1067, %v1070
    %vm1072 = vweird.f32 %v1066
    %vm1073 = vweird.f32 %v1067
    %vm1074 = vmor %vm1072, %vm1073
    %v1075 = vsel %vm1074, %v1067, %v1071
    %v1076 = vand.u32 2147483647, %v1066
    %vm1077 = vcmp.eq.f32.partialorder %v1076, 8.507059e+37
    %v1078 = vand.u32 %v1066, 2147483648
    %v1079 = vor.u32 1.1754944e-38, %v1078
    %v1080 = vsel %vm1077, %v1079, %v1075
    %v1081 = vmul.f32 1.0, %v1080
    %v1083 = vrot.slane %v1037, 4
    %v1085 = vadd.f32 %v994, %v1083
    %v1086 = vxor.u32 %v1085, 2147483648
    %v1087 = vmul.f32 %v1086, 1.442695
    %v1088 = vpow.pop %v1087
    %v1089 = vadd.f32 %v1088, 1.0
    %v1090 = vrcp.pop %v1089
    %v1091 = vmul.f32 %v1089, %v1090
    %v1092 = vsub.f32 1.0, %v1091
    %v1093 = vmul.f32 %v1090, %v1092
    %v1094 = vadd.f32 %v1090, %v1093
    %vm1095 = vweird.f32 %v1089
    %vm1096 = vweird.f32 %v1090
    %vm1097 = vmor %vm1095, %vm1096
    %v1098 = vsel %vm1097, %v1090, %v1094
    %v1099 = vand.u32 2147483647, %v1089
    %vm1100 = vcmp.eq.f32.partialorder %v1099, 8.507059e+37
    %v1101 = vand.u32 %v1089, 2147483648
    %v1102 = vor.u32 1.1754944e-38, %v1101
    %v1103 = vsel %vm1100, %v1102, %v1098
    %v1104 = vmul.f32 1.0, %v1103
    %v1105 = vadd.f32 %v1057, %v367
    %v1107 = vrot.slane %v1105, 4
    %v1109 = vmul.f32 %v1081, %v1107
    %v1110 = vadd.f32 %v995, %v1109
    %v1111 = vtanh.pop %v1110
    %v1112 = vsub.f32 1.0, %v1104
    %v1113 = vmul.f32 %v1112, %v1111
    %v1114 = vrot.slane %v991, 6
    %v1116 = vmul.f32 %v1104, %v1114
    %v1117 = vadd.f32 %v1113, %v1116
    %1118 = vst [vmem:[#allocation3 + $0x8] sm:$0x30] %v1117
    %v1119 = vld [vmem:[#allocation2 + $0x18] sm:$0xc0]
    %v1120 = vld [vmem:[#allocation2 + $0x20] sm:$0xc0]
    %v1121 = vld [vmem:[#allocation2 + $0x28] sm:$0xc0]
    %v1123 = vrot.slane %v1117, 4
    %1125 = vmatpush.msra.mxu0 %v259
    %1126 = vmatpush.msra.mxu0 %v256
    %1127 = vmatpush.msra.mxu0 %v253
    %1128 = vmatpush.msra.mxu0 %v250
    %1129 = vmatpush.msra.mxu0 %v247
    %1130 = vmatpush.msra.mxu0 %v244
    %1131 = vmatpush.msra.mxu0 %v241
    %1132 = vmatpush.msra.mxu0 %v238
    %1133 = vmatpush.msra.mxu0 %v235
    %1134 = vmatpush.msra.mxu0 %v232
    %1135 = vmatpush.msra.mxu0 %v229
    %1136 = vmatpush.msra.mxu0 %v226
    %1137 = vmatpush.msra.mxu0 %v223
    %1138 = vmatpush.msra.mxu0 %v220
    %1139 = vmatpush.msra.mxu0 %v217
    %1140 = vmatpush.msra.mxu0 %v214
    %1141 = vmatmul.f32.gmra.mxu0 %v1123
    %v1142 = vpop.f32.mrf.mxu0
    %v1143 = vadd.f32 0.0, %v1142
    %1144 = vdwg.mxu0
    %1145 = vmatpush.msra.mxu0 %v260
    %1146 = vmatpush.msra.mxu0 %v257
    %1147 = vmatpush.msra.mxu0 %v254
    %1148 = vmatpush.msra.mxu0 %v251
    %1149 = vmatpush.msra.mxu0 %v248
    %1150 = vmatpush.msra.mxu0 %v245
    %1151 = vmatpush.msra.mxu0 %v242
    %1152 = vmatpush.msra.mxu0 %v239
    %1153 = vmatpush.msra.mxu0 %v236
    %1154 = vmatpush.msra.mxu0 %v233
    %1155 = vmatpush.msra.mxu0 %v230
    %1156 = vmatpush.msra.mxu0 %v227
    %1157 = vmatpush.msra.mxu0 %v224
    %1158 = vmatpush.msra.mxu0 %v221
    %1159 = vmatpush.msra.mxu0 %v218
    %1160 = vmatpush.msra.mxu0 %v215
    %1161 = vmatmul.f32.gmra.mxu0 %v1123
    %v1162 = vpop.f32.mrf.mxu0
    %v1163 = vadd.f32 0.0, %v1162
    %1164 = vdwg.mxu0
    %1165 = vmatpush.msra.mxu0 %v261
    %1166 = vmatpush.msra.mxu0 %v258
    %1167 = vmatpush.msra.mxu0 %v255
    %1168 = vmatpush.msra.mxu0 %v252
    %1169 = vmatpush.msra.mxu0 %v249
    %1170 = vmatpush.msra.mxu0 %v246
    %1171 = vmatpush.msra.mxu0 %v243
    %1172 = vmatpush.msra.mxu0 %v240
    %1173 = vmatpush.msra.mxu0 %v237
    %1174 = vmatpush.msra.mxu0 %v234
    %1175 = vmatpush.msra.mxu0 %v231
    %1176 = vmatpush.msra.mxu0 %v228
    %1177 = vmatpush.msra.mxu0 %v225
    %1178 = vmatpush.msra.mxu0 %v222
    %1179 = vmatpush.msra.mxu0 %v219
    %1180 = vmatpush.msra.mxu0 %v216
    %1181 = vmatmul.f32.gmra.mxu0 %v1123
    %v1182 = vpop.f32.mrf.mxu0
    %v1183 = vadd.f32 0.0, %v1182
    %1184 = vdwg.mxu0
    %v1186 = vrot.slane %v1143, 2
    %v1188 = vadd.f32 %v1119, %v1186
    %v1189 = vxor.u32 %v1188, 2147483648
    %v1190 = vmul.f32 %v1189, 1.442695
    %v1191 = vpow.pop %v1190
    %v1192 = vadd.f32 %v1191, 1.0
    %v1193 = vrcp.pop %v1192
    %v1194 = vmul.f32 %v1192, %v1193
    %v1195 = vsub.f32 1.0, %v1194
    %v1196 = vmul.f32 %v1193, %v1195
    %v1197 = vadd.f32 %v1193, %v1196
    %vm1198 = vweird.f32 %v1192
    %vm1199 = vweird.f32 %v1193
    %vm1200 = vmor %vm1198, %vm1199
    %v1201 = vsel %vm1200, %v1193, %v1197
    %v1202 = vand.u32 2147483647, %v1192
    %vm1203 = vcmp.eq.f32.partialorder %v1202, 8.507059e+37
    %v1204 = vand.u32 %v1192, 2147483648
    %v1205 = vor.u32 1.1754944e-38, %v1204
    %v1206 = vsel %vm1203, %v1205, %v1201
    %v1207 = vmul.f32 1.0, %v1206
    %v1209 = vrot.slane %v1163, 2
    %v1211 = vadd.f32 %v1120, %v1209
    %v1212 = vxor.u32 %v1211, 2147483648
    %v1213 = vmul.f32 %v1212, 1.442695
    %v1214 = vpow.pop %v1213
    %v1215 = vadd.f32 %v1214, 1.0
    %v1216 = vrcp.pop %v1215
    %v1217 = vmul.f32 %v1215, %v1216
    %v1218 = vsub.f32 1.0, %v1217
    %v1219 = vmul.f32 %v1216, %v1218
    %v1220 = vadd.f32 %v1216, %v1219
    %vm1221 = vweird.f32 %v1215
    %vm1222 = vweird.f32 %v1216
    %vm1223 = vmor %vm1221, %vm1222
    %v1224 = vsel %vm1223, %v1216, %v1220
    %v1225 = vand.u32 2147483647, %v1215
    %vm1226 = vcmp.eq.f32.partialorder %v1225, 8.507059e+37
    %v1227 = vand.u32 %v1215, 2147483648
    %v1228 = vor.u32 1.1754944e-38, %v1227
    %v1229 = vsel %vm1226, %v1228, %v1224
    %v1230 = vmul.f32 1.0, %v1229
    %v1231 = vadd.f32 %v1183, %v367
    %v1233 = vrot.slane %v1231, 2
    %v1235 = vmul.f32 %v1207, %v1233
    %v1236 = vadd.f32 %v1121, %v1235
    %v1237 = vtanh.pop %v1236
    %v1238 = vsub.f32 1.0, %v1230
    %v1239 = vmul.f32 %v1238, %v1237
    %v1240 = vrot.slane %v1117, 6
    %v1242 = vmul.f32 %v1230, %v1240
    %v1243 = vadd.f32 %v1239, %v1242
    %1244 = vst [vmem:[#allocation3 + $0x8] sm:$0xc0] %v1243
    %v1245 = vld [vmem:[#allocation3] sm:$0xff]
    %v1246 = vld [vmem:[#allocation3 + $0x8] sm:$0xff]
    %v1247 = vld [vmem:[#allocation12] sm:$0xff]
    %v1248 = vld [vmem:[#allocation12 + $0x8] sm:$0xff]
    %v1249 = vld [vmem:[#allocation12 + $0x10] sm:$0xff]
    %v1250 = vld [vmem:[#allocation12 + $0x18] sm:$0xff]
    %v1251 = vld [vmem:[#allocation12 + $0x20] sm:$0xff]
    %v1252 = vld [vmem:[#allocation12 + $0x28] sm:$0xff]
    %v1253 = vld [vmem:[#allocation12 + $0x30] sm:$0xff]
    %v1254 = vld [vmem:[#allocation12 + $0x38] sm:$0xff]
    %v1255 = vld [vmem:[#allocation12 + $0x40] sm:$0xff]
    %v1256 = vld [vmem:[#allocation12 + $0x48] sm:$0xff]
    %v1257 = vld [vmem:[#allocation12 + $0x50] sm:$0xff]
    %v1258 = vld [vmem:[#allocation12 + $0x58] sm:$0xff]
    %v1259 = vld [vmem:[#allocation12 + $0x60] sm:$0xff]
    %v1260 = vld [vmem:[#allocation12 + $0x68] sm:$0xff]
    %v1261 = vld [vmem:[#allocation12 + $0x70] sm:$0xff]
    %v1262 = vld [vmem:[#allocation12 + $0x78] sm:$0xff]
    %v1263 = vld [vmem:[%s6] sm:$0x1]
    %v1265 = vperm.slane %v1263, 0
    %1267 = vmatpush.msra.mxu0 %v1262
    %1268 = vmatpush.msra.mxu0 %v1261
    %1269 = vmatpush.msra.mxu0 %v1260
    %1270 = vmatpush.msra.mxu0 %v1259
    %1271 = vmatpush.msra.mxu0 %v1258
    %1272 = vmatpush.msra.mxu0 %v1257
    %1273 = vmatpush.msra.mxu0 %v1256
    %1274 = vmatpush.msra.mxu0 %v1255
    %1275 = vmatpush.msra.mxu0 %v1254
    %1276 = vmatpush.msra.mxu0 %v1253
    %1277 = vmatpush.msra.mxu0 %v1252
    %1278 = vmatpush.msra.mxu0 %v1251
    %1279 = vmatpush.msra.mxu0 %v1250
    %1280 = vmatpush.msra.mxu0 %v1249
    %1281 = vmatpush.msra.mxu0 %v1248
    %1282 = vmatpush.msra.mxu0 %v1247
    %1283 = vmatmul.f32.gmra.mxu0 %v1245
    %v1284 = vpop.f32.mrf.mxu0
    %v1285 = vadd.f32 %v1265, %v1284
    %1286 = vmatmul.f32.gmra.mxu0 %v1246
    %v1287 = vpop.f32.mrf.mxu0
    %v1288 = vadd.f32 %v1265, %v1287
    %1289 = vdwg.mxu0
    %v1290 = vtanh.pop %v1285
    %v1291 = vtanh.pop %v1288
    %1292 = vst [vmem:[#allocation13] sm:$0xff] %v1290
    %1293 = vst [vmem:[#allocation13 + $0x8] sm:$0xff] %v1291
    // Predicated region
    $region50: #{tpu_custom_call.1} parent=1 // pred_check
      _
    $region51: #{tpu_custom_call.1} parent=1 // pred_check_branch
      %1295 = sbr.rel (0) target = $region53
    $region52: #{tpu_custom_call.1} parent=1 // pred_region
      %1297 = vsyncadd [#allocation6], 0
      %s1298 = sshll.u32 [#allocation13], 4
      %s1299 = int_to_ptr.vmem [resolvable:$true] %s1298
      %s1300 = sshll.u32 %s7, 4
      %s1301 = int_to_ptr.hbm [resolvable:$true] %s1300
      %1306 = dma.vmem_to_hbm [thread:$0]  %s1299, 256, %s1301, [#allocation6], 128, 128, 8
    $region53: #{tpu_custom_call.1} parent=1 // pred_fallthru
      _
    // Predicated region
    $region54: #{tpu_custom_call.1} parent=1 // pred_check
      _
    $region55: #{tpu_custom_call.1} parent=1 // pred_check_branch
      %1308 = sbr.rel (0) target = $region57
    $region56: #{tpu_custom_call.1} parent=1 // pred_region
      %1310 = dma.done [#allocation6], 256
    $region57: #{tpu_custom_call.1} parent=1 // pred_fallthru
      _
    %1311 = vsyncpa [#allocation5], 1
    %1312 = vsyncpa [#allocation8], 1
    %1313 = vsyncpa [#allocation11], 1
    %1314 = vsyncpa [#allocation6], 1

</llo_original>
